<compile_context>
chip_gen: v5e
topology: v5e:2x2
jax: 0.10.0
libtpu: 0.0.40
codegen_flags: <defaults>
</compile_context>

<pallas_src>
import math

import jax
import jax.numpy as jnp
import numpy as np
from jax.experimental import pallas as pl
from jax.experimental.pallas import tpu as pltpu


def _round_up(v, m):
    return (v + m - 1) // m * m


# ----------------------------- chip heuristics ------------------------------ #

def _default_h_tile():
    """v5e MXU is 4x(128x128) -> K/N=256 saturates it; v6e/v7x want >=512."""
    try:
        kind = jax.devices()[0].device_kind.lower()
    except Exception:
        kind = ""
    if ("v5 lite" in kind) or ("v5e" in kind) or ("v5lite" in kind):
        return 256
    return 512


def _vmem_capacity_bytes():
    try:
        return int(pltpu.get_tpu_info().vmem_capacity_bytes)
    except Exception:
        return 64 * 1024 * 1024          # v7x per-TC VMEM (most conservative)


def _vmem_limit_bytes(Sp, Mp, Cp, TH):
    """Size the scoped-VMEM limit from the actual block bytes (+headroom)."""
    need = (
        2 * Sp * Mp * 2                  # tokens (bf16), worst case 2 buffers
        + 2 * Sp * Mp * 4                # output block (f32)
        + 2 * (Mp * TH + TH * Mp) * 2    # w1 + w2 tiles (bf16, double-buffered)
        + 2 * (TH + Mp) * 4              # b1 + b2 tiles
        + 2 * 3 * Cp * 128 * 4           # tiny index / gate-weight blocks
        + Cp * Mp * (2 + 4)              # xe (bf16) + eo (f32) scratch
    )
    need = int(need * 1.25) + (2 << 20)  # headroom for compiler temps
    cap = _vmem_capacity_bytes()
    cap75 = int(cap * 0.75)              # leave headroom (< ~48 MiB on v7x)
    if need <= cap75:
        return min(max(need, 32 << 20), cap75)
    return min(need, cap)


# ------------------------------ Pallas kernel ------------------------------ #

def _moe_expert_kernel(idx_c1_ref, idx_1c_ref, gw_ref, x_ref, w1_ref, b1_ref,
                       w2_ref, b2_ref, o_ref, xe_ref, eo_ref):
    """Grid = (E, H_tiles): fused dispatch -> H-tiled FFN -> combine.

    idx_c1_ref : (C, 1) int32  token index feeding capacity slot c
    idx_1c_ref : (1, C) int32  same indices (lane-major, for the combine)
    gw_ref     : (C, 1) f32    gate weight per slot (0 => empty / padded slot)
    x_ref      : (S, M) bf16   all tokens (lane-padded model_dim)
    w1_ref     : (M, TH) bf16  fc1 tile            b1_ref : (1, TH) f32
    w2_ref     : (TH, M) bf16  fc2 tile            b2_ref : (1, M)  f32
    o_ref      : (S, M) f32    output, VMEM-resident accumulator over experts
    xe_ref     : (C, M) bf16   scratch: gathered tokens of current expert
    eo_ref     : (C, M) f32    scratch: expert FFN output accumulated over H
    """
    e = pl.program_id(0)
    h = pl.program_id(1)
    nh = pl.num_programs(1)

    C, M = eo_ref.shape
    S = x_ref.shape[0]

    @pl.when((e == 0) & (h == 0))
    def _init_out():
        o_ref[...] = jnp.zeros_like(o_ref)

    @pl.when(h == 0)
    def _dispatch():
        # Binary dispatch (is_postscore=True): gather this expert's tokens via
        # an in-register one-hot built from O(C) indices -> MXU matmul.
        # (bf16 one-hot x bf16 tokens with f32 accumulation is exact.)
        s_ids = jax.lax.broadcasted_iota(jnp.int32, (C, S), 1)
        disp = jnp.where(s_ids == idx_c1_ref[...], 1.0, 0.0).astype(jnp.bfloat16)
        xe_ref[...] = jnp.dot(
            disp, x_ref[...], preferred_element_type=jnp.float32
        ).astype(jnp.bfloat16)
        eo_ref[...] = jnp.zeros_like(eo_ref)

    # FFN for this H tile: bf16 inputs, f32 accumulation; ReLU kept in f32.
    # b1 is inside the ReLU so it must be applied per H tile.
    hid = jnp.dot(xe_ref[...], w1_ref[...], preferred_element_type=jnp.float32)
    hid = jnp.maximum(hid + b1_ref[...], 0.0)
    eo_ref[...] += jnp.dot(hid.astype(jnp.bfloat16), w2_ref[...],
                           preferred_element_type=jnp.float32)

    @pl.when(h == nh - 1)
    def _combine():
        # b2 + gate weight applied once per expert (hoisted out of the H loop),
        # then scatter-add back to the token rows.  The whole combine stays in
        # f32 (exact {0,1} one-hot, f32 expert outputs, f32 accumulation) --
        # no bf16 round-trip before cross-expert summation.
        eo = (eo_ref[...] + b2_ref[...]) * gw_ref[...]
        s_ids = jax.lax.broadcasted_iota(jnp.int32, (S, C), 0)
        comb = jnp.where(s_ids == idx_1c_ref[...], 1.0, 0.0)      # f32
        o_ref[...] += jnp.dot(comb, eo, preferred_element_type=jnp.float32)


# ------------------------------ host wrappers ------------------------------ #

def route_tokens(x, wg, *, top_k, capacity_factor, alignment=4,
                 normalize_gate=True):
    """extract_critical-equivalent routing producing compact O(E*C) metadata."""
    S, _ = x.shape
    E = wg.shape[1]

    # Gate logits: tiny (S, E) GEMM -> leave to XLA; the Pallas work is the FFN.
    logits = jnp.dot(x.astype(jnp.float32), wg.astype(jnp.float32))
    scores = jax.nn.softmax(logits, axis=1)

    topk_vals, topk_idx = jax.lax.top_k(scores, top_k)            # (S, k)
    if normalize_gate and top_k > 1:
        topk_vals = topk_vals / jnp.maximum(
            jnp.sum(topk_vals, axis=-1, keepdims=True), 1e-9)

    # Position within each expert buffer: rank-major priority (Tutel default).
    masks = jax.nn.one_hot(topk_idx, E, dtype=jnp.int32)          # (S, k, E)
    within = jnp.cumsum(masks, axis=0) - masks
    per_rank = jnp.sum(masks, axis=0)                             # (k, E)
    rank_off = jnp.cumsum(per_rank, axis=0) - per_rank
    loc = jnp.sum((within + rank_off[None]) * masks, axis=-1)     # (S, k)

    # Static capacity (Tutel: top_k * ceil(cf * S / E), aligned).
    capacity = top_k * int(capacity_factor * ((S + E - 1) // E))
    capacity = ((capacity + alignment - 1) // alignment) * alignment

    # Compact per-expert slot->token / slot->gate tables; no O(E*C*S) tensors.
    flat_e = topk_idx.reshape(-1)
    flat_slot = loc.reshape(-1)
    flat_gate = topk_vals.reshape(-1).astype(jnp.float32)
    flat_tok = jnp.repeat(jnp.arange(S, dtype=jnp.int32), top_k)
    slot_d = jnp.where(flat_slot < capacity, flat_slot, capacity)  # OOB -> drop
    token_idx = (jnp.zeros((E, capacity), jnp.int32)
                 .at[flat_e, slot_d].set(flat_tok, mode='drop'))
    gate_w = (jnp.zeros((E, capacity), jnp.float32)
              .at[flat_e, slot_d].set(flat_gate, mode='drop'))

    # gshard aux loss
    top1_mask = jax.nn.one_hot(topk_idx[:, 0], E, dtype=jnp.float32)
    l_aux = jnp.sum(jnp.mean(scores, axis=0) * jnp.mean(top1_mask, axis=0)) * E

    return token_idx, gate_w, capacity, l_aux


def prepare_expert_params(w1, b1, w2, b2, *, h_tile=None):
    """Pad / bf16-cast expert weights ONCE (hoisted out of the forward path).

    Padding is skipped entirely when M / H are already lane-aligned multiples.
    """
    if h_tile is None:
        h_tile = _default_h_tile()
    assert h_tile % 128 == 0
    E, M, H = w1.shape
    f32, bf16 = jnp.float32, jnp.bfloat16

    Mp = _round_up(M, 128)
    Hp = _round_up(H, 128)
    TH = min(h_tile, Hp)
    Hp = _round_up(Hp, TH)   # padded hidden cols contribute exactly 0 downstream

    if (M, H) == (Mp, Hp) and w1.dtype == bf16:
        w1p = w1
    else:
        w1p = jnp.zeros((E, Mp, Hp), bf16).at[:, :M, :H].set(w1.astype(bf16))
    if (H, M) == (Hp, Mp) and w2.dtype == bf16:
        w2p = w2
    else:
        w2p = jnp.zeros((E, Hp, Mp), bf16).at[:, :H, :M].set(w2.astype(bf16))
    b1p = jnp.zeros((E, 1, Hp), f32).at[:, 0, :H].set(b1.astype(f32))
    b2p = jnp.zeros((E, 1, Mp), f32).at[:, 0, :M].set(b2.astype(f32))

    params = {"w1": w1p, "b1": b1p, "w2": w2p, "b2": b2p,
              "E": E, "M": M, "H": H, "Mp": Mp, "Hp": Hp, "TH": TH}
    jax.block_until_ready((w1p, b1p, w2p, b2p))   # pay padding cost at init
    return params


def moe_experts_pallas(x, token_idx, gate_w, params):
    """Fused dispatch -> per-expert FFN (H-tiled, bf16/f32-acc) -> combine."""
    S, M = x.shape
    E, C = token_idx.shape
    assert M == params["M"] and E == params["E"]
    Mp, Hp, TH = params["Mp"], params["Hp"], params["TH"]
    nh = Hp // TH

    # Lane (128) / bf16-sublane (16) aligned padded sizes.  Padded capacity
    # slots carry gate weight 0, so semantics (alignment=4 capacity) are kept.
    Sp = _round_up(S, 16)
    Cp = _round_up(C, 16)

    f32, bf16 = jnp.float32, jnp.bfloat16
    xp = jnp.zeros((Sp, Mp), bf16).at[:S, :M].set(x.astype(bf16))
    idx_c1 = jnp.zeros((E, Cp, 1), jnp.int32).at[:, :C, 0].set(token_idx)
    idx_1c = jnp.zeros((E, 1, Cp), jnp.int32).at[:, 0, :C].set(token_idx)
    gw_c1 = jnp.zeros((E, Cp, 1), f32).at[:, :C, 0].set(gate_w)

    vmem_limit = _vmem_limit_bytes(Sp, Mp, Cp, TH)

    def build(x_single_buffered):
        # x's block index never changes across the grid; single-buffering it
        # saves Sp*Mp*2 bytes of VMEM with zero pipelining downside.
        x_kwargs = {"pipeline_mode": pl.Buffered(1)} if x_single_buffered else {}
        return pl.pallas_call(
            _moe_expert_kernel,
            out_shape=jax.ShapeDtypeStruct((Sp, Mp), jnp.float32),
            grid_spec=pltpu.PrefetchScalarGridSpec(
                num_scalar_prefetch=0,
                grid=(E, nh),                                   # both reduction-like
                in_specs=[
                    pl.BlockSpec((None, Cp, 1), lambda e, h: (e, 0, 0)),   # idx (C,1)
                    pl.BlockSpec((None, 1, Cp), lambda e, h: (e, 0, 0)),   # idx (1,C)
                    pl.BlockSpec((None, Cp, 1), lambda e, h: (e, 0, 0)),   # gate w
                    pl.BlockSpec((Sp, Mp), lambda e, h: (0, 0), **x_kwargs),  # tokens
                    pl.BlockSpec((None, Mp, TH), lambda e, h: (e, 0, h)),  # w1 tile
                    pl.BlockSpec((None, 1, TH), lambda e, h: (e, 0, h)),   # b1 tile
                    pl.BlockSpec((None, TH, Mp), lambda e, h: (e, h, 0)),  # w2 tile
                    pl.BlockSpec((None, 1, Mp), lambda e, h: (e, 0, 0)),   # b2
                ],
                out_specs=pl.BlockSpec((Sp, Mp), lambda e, h: (0, 0)),
                scratch_shapes=[
                    pltpu.VMEM((Cp, Mp), bf16),   # gathered tokens (current expert)
                    pltpu.VMEM((Cp, Mp), f32),    # expert output acc over H tiles
                ],
            ),
            compiler_params=pltpu.CompilerParams(
                dimension_semantics=("arbitrary", "arbitrary"),
                vmem_limit_bytes=vmem_limit,
            ),
        )

    args = (idx_c1, idx_1c, gw_c1, xp,
            params["w1"], params["b1"], params["w2"], params["b2"])
    try:
        out = build(True)(*args)
    except Exception:
        out = build(False)(*args)   # fallback if Buffered(1) is rejected
    return out[:S, :M]


def moe_layer_forward(x_in, wg, expert_params, *, top_k=2, capacity_factor=1.0):
    """MOELayer.forward equivalent (single device, eval mode, reserve_dims=1)."""
    original_shape = x_in.shape
    original_dtype = x_in.dtype
    M = original_shape[-1]
    x = x_in.reshape(-1, M).astype(jnp.float32)

    token_idx, gate_w, _, l_aux = route_tokens(
        x, wg, top_k=top_k, capacity_factor=capacity_factor)
    y = moe_experts_pallas(x, token_idx, gate_w, expert_params)
    return y.reshape(original_shape).astype(original_dtype), l_aux


def _reference_moe(x, token_idx, gate_w, w1, b1, w2, b2):
    """Pure-JAX reference using the same bf16-quantized operands, f32 combine."""
    f32, bf16 = jnp.float32, jnp.bfloat16
    xb = x.astype(bf16).astype(f32)
    w1b = w1.astype(bf16).astype(f32)
    w2b = w2.astype(bf16).astype(f32)
    xe = xb[token_idx]                                             # (E, C, M)
    h = jnp.maximum(jnp.einsum('ecm,emh->ech', xe, w1b) + b1[:, None, :], 0.0)
    eo = jnp.einsum('ech,ehm->ecm', h.astype(bf16).astype(f32), w2b)
    eo = (eo + b2[:, None, :]) * gate_w[:, :, None]
    return jnp.zeros(x.shape, f32).at[token_idx.reshape(-1)].add(
        eo.reshape(-1, x.shape[1]))


# ---------------------------------- main ----------------------------------- #

if __name__ == "__main__":
    B, T, M, H, E, K = 2, 10, 64, 256, 4, 2     # model_dim must be even

    key = jax.random.PRNGKey(0)
    kwg, kw1, kb1, kw2, kb2, kx = jax.random.split(key, 6)
    wg = jax.random.normal(kwg, (M, E), jnp.float32) * 0.1
    w1 = jax.random.normal(kw1, (E, M, H), jnp.float32) * (1.0 / math.sqrt(M))
    b1 = jax.random.normal(kb1, (E, H), jnp.float32) * 0.01
    w2 = jax.random.normal(kw2, (E, H, M), jnp.float32) * (1.0 / math.sqrt(H))
    b2 = jax.random.normal(kb2, (E, M), jnp.float32) * 0.01
    x = jax.random.normal(kx, (B, T, M), jnp.float32)

    # Weight padding / casting is done ONCE here (hoisted out of forward).
    expert_params = prepare_expert_params(w1, b1, w2, b2)

    y, l_aux = moe_layer_forward(x, wg, expert_params,
                                 top_k=K, capacity_factor=1.0)
    y = jax.block_until_ready(y)
    l_aux = jax.block_until_ready(l_aux)

    # correctness check against a pure-JAX reference of the hot path
    x2d = x.reshape(-1, M)
    token_idx, gate_w, _, _ = route_tokens(x2d, wg, top_k=K, capacity_factor=1.0)
    y_ref = _reference_moe(x2d, token_idx, gate_w, w1, b1, w2, b2)
    np.testing.assert_allclose(np.asarray(y.reshape(-1, M)), np.asarray(y_ref),
                               rtol=2e-2, atol=2e-2)
    assert y.shape == x.shape and bool(jnp.isfinite(l_aux))

    print("KERNEL_OK")
</pallas_src>

<mosaic_0001>
module attributes {stable_mosaic.version = 11 : i64} {
  func.func @_moe_expert_kernel(%arg0: i32, %arg1: i32, %arg2: memref<1x16x1xi32, #tpu.memory_space<vmem>>, %arg3: memref<1x1x16xi32, #tpu.memory_space<vmem>>, %arg4: memref<1x16x1xf32, #tpu.memory_space<vmem>>, %arg5: memref<32x128xbf16, #tpu.memory_space<vmem>>, %arg6: memref<1x128x256xbf16, #tpu.memory_space<vmem>>, %arg7: memref<1x1x256xf32, #tpu.memory_space<vmem>>, %arg8: memref<1x256x128xbf16, #tpu.memory_space<vmem>>, %arg9: memref<1x1x128xf32, #tpu.memory_space<vmem>>, %arg10: memref<32x128xf32, #tpu.memory_space<vmem>>, %arg11: memref<16x128xbf16, #tpu.memory_space<vmem>>, %arg12: memref<16x128xf32, #tpu.memory_space<vmem>>) attributes {dimension_semantics = [#tpu.dimension_semantics<arbitrary>, #tpu.dimension_semantics<arbitrary>], iteration_bounds = array<i64: 4, 1>, scalar_prefetch = 0 : i64, scratch_operands = 2 : i64, tpu.core_type = #tpu.core_type<tc>, window_params = [{transform_indices = @transform_0, window_bounds = array<i64: 1, 16, 1>}, {transform_indices = @transform_1, window_bounds = array<i64: 1, 1, 16>}, {transform_indices = @transform_2, window_bounds = array<i64: 1, 16, 1>}, {pipeline_mode = #tpu.pipeline_mode<synchronous>, transform_indices = @transform_3, window_bounds = array<i64: 32, 128>}, {transform_indices = @transform_4, window_bounds = array<i64: 1, 128, 256>}, {transform_indices = @transform_5, window_bounds = array<i64: 1, 1, 256>}, {transform_indices = @transform_6, window_bounds = array<i64: 1, 256, 128>}, {transform_indices = @transform_7, window_bounds = array<i64: 1, 1, 128>}, {pipeline_mode = #tpu.pipeline_mode<synchronous>, transform_indices = @transform_8, window_bounds = array<i64: 32, 128>}]} {
    %c0_i32 = arith.constant 0 : i32
    %0 = arith.cmpi eq, %arg0, %c0_i32 : i32
    %c0_i32_0 = arith.constant 0 : i32
    %1 = arith.cmpi eq, %arg1, %c0_i32_0 : i32
    %2 = arith.andi %0, %1 : i1
    %3 = arith.extui %2 : i1 to i32
    %c0_i32_1 = arith.constant 0 : i32
    %4 = arith.cmpi ne, %3, %c0_i32_1 : i32
    scf.if %4 {
      %cst_22 = arith.constant 0.000000e+00 : f32
      %28 = vector.broadcast %cst_22 : f32 to vector<32x128xf32>
      %c0_23 = arith.constant 0 : index
      %c0_24 = arith.constant 0 : index
      %29 = vector.load %arg10[%c0_23, %c0_24] : memref<32x128xf32, #tpu.memory_space<vmem>>, vector<32x128xf32>
      tpu.vector_store %arg10[%c0_23, %c0_24], %28 {strides = array<i32>} : memref<32x128xf32, #tpu.memory_space<vmem>>, vector<32x128xf32>,
    } else {
    }
    %c0_i32_2 = arith.constant 0 : i32
    %5 = arith.cmpi eq, %arg1, %c0_i32_2 : i32
    %6 = arith.extui %5 : i1 to i32
    %c0_i32_3 = arith.constant 0 : i32
    %7 = arith.cmpi ne, %6, %c0_i32_3 : i32
    scf.if %7 {
      %28 = tpu.iota {dimensions = array<i32: 1>} : vector<16x32xi32>
      %c0_22 = arith.constant 0 : index
      %c0_23 = arith.constant 0 : index
      %c0_24 = arith.constant 0 : index
      %29 = vector.load %arg2[%c0_22, %c0_23, %c0_24] : memref<1x16x1xi32, #tpu.memory_space<vmem>>, vector<1x16x1xi32>
      %30 = vector.shape_cast %29 : vector<1x16x1xi32> to vector<16x1xi32>
      %31 = vector.broadcast %30 : vector<16x1xi32> to vector<16x32xi32>
      %32 = arith.cmpi eq, %28, %31 : vector<16x32xi32>
      %cst_25 = arith.constant 1.000000e+00 : f32
      %cst_26 = arith.constant 0.000000e+00 : f32
      %33 = vector.broadcast %cst_25 : f32 to vector<16x32xf32>
      %34 = vector.broadcast %cst_26 : f32 to vector<16x32xf32>
      %35 = arith.select %32, %33, %34 : vector<16x32xi1>, vector<16x32xf32>
      %36 = arith.truncf %35 : vector<16x32xf32> to vector<16x32xbf16>
      %c0_27 = arith.constant 0 : index
      %c0_28 = arith.constant 0 : index
      %37 = vector.load %arg5[%c0_27, %c0_28] : memref<32x128xbf16, #tpu.memory_space<vmem>>, vector<32x128xbf16>
      %cst_29 = arith.constant dense<0.000000e+00> : vector<16x128xf32>
      %38 = tpu.matmul %36, %37, %cst_29 {dimension_numbers = #tpu.dot_dimension_numbers<[1], [0], [0], [1], [0, 0, 1, 1], [], []>} : vector<16x32xbf16>, vector<32x128xbf16>, vector<16x128xf32> -> vector<16x128xf32>
      %39 = arith.truncf %38 : vector<16x128xf32> to vector<16x128xbf16>
      %c0_30 = arith.constant 0 : index
      %c0_31 = arith.constant 0 : index
      %40 = vector.load %arg11[%c0_30, %c0_31] : memref<16x128xbf16, #tpu.memory_space<vmem>>, vector<16x128xbf16>
      tpu.vector_store %arg11[%c0_30, %c0_31], %39 {strides = array<i32>} : memref<16x128xbf16, #tpu.memory_space<vmem>>, vector<16x128xbf16>,
      %cst_32 = arith.constant 0.000000e+00 : f32
      %41 = vector.broadcast %cst_32 : f32 to vector<16x128xf32>
      %c0_33 = arith.constant 0 : index
      %c0_34 = arith.constant 0 : index
      %42 = vector.load %arg12[%c0_33, %c0_34] : memref<16x128xf32, #tpu.memory_space<vmem>>, vector<16x128xf32>
      tpu.vector_store %arg12[%c0_33, %c0_34], %41 {strides = array<i32>} : memref<16x128xf32, #tpu.memory_space<vmem>>, vector<16x128xf32>,
    } else {
    }
    %c0 = arith.constant 0 : index
    %c0_4 = arith.constant 0 : index
    %8 = vector.load %arg11[%c0, %c0_4] : memref<16x128xbf16, #tpu.memory_space<vmem>>, vector<16x128xbf16>
    %c0_5 = arith.constant 0 : index
    %c0_6 = arith.constant 0 : index
    %c0_7 = arith.constant 0 : index
    %9 = vector.load %arg6[%c0_5, %c0_6, %c0_7] : memref<1x128x256xbf16, #tpu.memory_space<vmem>>, vector<1x128x256xbf16>
    %10 = vector.shape_cast %9 : vector<1x128x256xbf16> to vector<128x256xbf16>
    %cst = arith.constant dense<0.000000e+00> : vector<16x256xf32>
    %11 = tpu.matmul %8, %10, %cst {dimension_numbers = #tpu.dot_dimension_numbers<[1], [0], [0], [1], [0, 0, 1, 1], [], []>} : vector<16x128xbf16>, vector<128x256xbf16>, vector<16x256xf32> -> vector<16x256xf32>
    %c0_8 = arith.constant 0 : index
    %c0_9 = arith.constant 0 : index
    %c0_10 = arith.constant 0 : index
    %12 = vector.load %arg7[%c0_8, %c0_9, %c0_10] : memref<1x1x256xf32, #tpu.memory_space<vmem>>, vector<1x1x256xf32>
    %13 = vector.shape_cast %12 : vector<1x1x256xf32> to vector<1x256xf32>
    %14 = vector.broadcast %13 : vector<1x256xf32> to vector<16x256xf32>
    %15 = arith.addf %11, %14 : vector<16x256xf32>
    %cst_11 = arith.constant 0.000000e+00 : f32
    %16 = vector.broadcast %cst_11 : f32 to vector<16x256xf32>
    %17 = arith.maximumf %15, %16 : vector<16x256xf32>
    %c0_12 = arith.constant 0 : index
    %c0_13 = arith.constant 0 : index
    %18 = vector.load %arg12[%c0_12, %c0_13] : memref<16x128xf32, #tpu.memory_space<vmem>>, vector<16x128xf32>
    %19 = arith.truncf %17 : vector<16x256xf32> to vector<16x256xbf16>
    %c0_14 = arith.constant 0 : index
    %c0_15 = arith.constant 0 : index
    %c0_16 = arith.constant 0 : index
    %20 = vector.load %arg8[%c0_14, %c0_15, %c0_16] : memref<1x256x128xbf16, #tpu.memory_space<vmem>>, vector<1x256x128xbf16>
    %21 = vector.shape_cast %20 : vector<1x256x128xbf16> to vector<256x128xbf16>
    %cst_17 = arith.constant dense<0.000000e+00> : vector<16x128xf32>
    %22 = tpu.matmul %19, %21, %cst_17 {dimension_numbers = #tpu.dot_dimension_numbers<[1], [0], [0], [1], [0, 0, 1, 1], [], []>} : vector<16x256xbf16>, vector<256x128xbf16>, vector<16x128xf32> -> vector<16x128xf32>
    %23 = arith.addf %18, %22 : vector<16x128xf32>
    %c0_18 = arith.constant 0 : index
    %c0_19 = arith.constant 0 : index
    %24 = vector.load %arg12[%c0_18, %c0_19] : memref<16x128xf32, #tpu.memory_space<vmem>>, vector<16x128xf32>
    tpu.vector_store %arg12[%c0_18, %c0_19], %23 {strides = array<i32>} : memref<16x128xf32, #tpu.memory_space<vmem>>, vector<16x128xf32>,
    %c0_i32_20 = arith.constant 0 : i32
    %25 = arith.cmpi eq, %arg1, %c0_i32_20 : i32
    %26 = arith.extui %25 : i1 to i32
    %c0_i32_21 = arith.constant 0 : i32
    %27 = arith.cmpi ne, %26, %c0_i32_21 : i32
    scf.if %27 {
      %c0_22 = arith.constant 0 : index
      %c0_23 = arith.constant 0 : index
      %28 = vector.load %arg12[%c0_22, %c0_23] : memref<16x128xf32, #tpu.memory_space<vmem>>, vector<16x128xf32>
      %c0_24 = arith.constant 0 : index
      %c0_25 = arith.constant 0 : index
      %c0_26 = arith.constant 0 : index
      %29 = vector.load %arg9[%c0_24, %c0_25, %c0_26] : memref<1x1x128xf32, #tpu.memory_space<vmem>>, vector<1x1x128xf32>
      %30 = vector.shape_cast %29 : vector<1x1x128xf32> to vector<1x128xf32>
      %31 = vector.broadcast %30 : vector<1x128xf32> to vector<16x128xf32>
      %32 = arith.addf %28, %31 : vector<16x128xf32>
      %c0_27 = arith.constant 0 : index
      %c0_28 = arith.constant 0 : index
      %c0_29 = arith.constant 0 : index
      %33 = vector.load %arg4[%c0_27, %c0_28, %c0_29] : memref<1x16x1xf32, #tpu.memory_space<vmem>>, vector<1x16x1xf32>
      %34 = vector.shape_cast %33 : vector<1x16x1xf32> to vector<16x1xf32>
      %35 = vector.broadcast %34 : vector<16x1xf32> to vector<16x128xf32>
      %36 = arith.mulf %32, %35 : vector<16x128xf32>
      %37 = tpu.iota {dimensions = array<i32: 0>} : vector<32x16xi32>
      %c0_30 = arith.constant 0 : index
      %c0_31 = arith.constant 0 : index
      %c0_32 = arith.constant 0 : index
      %38 = vector.load %arg3[%c0_30, %c0_31, %c0_32] : memref<1x1x16xi32, #tpu.memory_space<vmem>>, vector<1x1x16xi32>
      %39 = vector.shape_cast %38 : vector<1x1x16xi32> to vector<1x16xi32>
      %40 = vector.broadcast %39 : vector<1x16xi32> to vector<32x16xi32>
      %41 = arith.cmpi eq, %37, %40 : vector<32x16xi32>
      %cst_33 = arith.constant 1.000000e+00 : f32
      %cst_34 = arith.constant 0.000000e+00 : f32
      %42 = vector.broadcast %cst_33 : f32 to vector<32x16xf32>
      %43 = vector.broadcast %cst_34 : f32 to vector<32x16xf32>
      %44 = arith.select %41, %42, %43 : vector<32x16xi1>, vector<32x16xf32>
      %c0_35 = arith.constant 0 : index
      %c0_36 = arith.constant 0 : index
      %45 = vector.load %arg10[%c0_35, %c0_36] : memref<32x128xf32, #tpu.memory_space<vmem>>, vector<32x128xf32>
      %cst_37 = arith.constant dense<0.000000e+00> : vector<32x128xf32>
      %46 = tpu.matmul %44, %36, %cst_37 {dimension_numbers = #tpu.dot_dimension_numbers<[1], [0], [0], [1], [0, 0, 1, 1], [], []>} : vector<32x16xf32>, vector<16x128xf32>, vector<32x128xf32> -> vector<32x128xf32>
      %47 = arith.addf %45, %46 : vector<32x128xf32>
      %c0_38 = arith.constant 0 : index
      %c0_39 = arith.constant 0 : index
      %48 = vector.load %arg10[%c0_38, %c0_39] : memref<32x128xf32, #tpu.memory_space<vmem>>, vector<32x128xf32>
      tpu.vector_store %arg10[%c0_38, %c0_39], %47 {strides = array<i32>} : memref<32x128xf32, #tpu.memory_space<vmem>>, vector<32x128xf32>,
    } else {
    }
    return
  }
  func.func @transform_0(%arg0: i32, %arg1: i32) -> (i32, i32, i32) {
    %c0_i32 = arith.constant 0 : i32
    %c0_i32_0 = arith.constant 0 : i32
    %c0_i32_1 = arith.constant 0 : i32
    return %arg0, %c0_i32, %c0_i32_0 : i32, i32, i32
  }
  func.func @transform_1(%arg0: i32, %arg1: i32) -> (i32, i32, i32) {
    %c0_i32 = arith.constant 0 : i32
    %c0_i32_0 = arith.constant 0 : i32
    %c0_i32_1 = arith.constant 0 : i32
    return %arg0, %c0_i32, %c0_i32_0 : i32, i32, i32
  }
  func.func @transform_2(%arg0: i32, %arg1: i32) -> (i32, i32, i32) {
    %c0_i32 = arith.constant 0 : i32
    %c0_i32_0 = arith.constant 0 : i32
    %c0_i32_1 = arith.constant 0 : i32
    return %arg0, %c0_i32, %c0_i32_0 : i32, i32, i32
  }
  func.func @transform_3(%arg0: i32, %arg1: i32) -> (i32, i32) {
    %c0_i32 = arith.constant 0 : i32
    %c0_i32_0 = arith.constant 0 : i32
    %c0_i32_1 = arith.constant 0 : i32
    return %c0_i32, %c0_i32_0 : i32, i32
  }
  func.func @transform_4(%arg0: i32, %arg1: i32) -> (i32, i32, i32) {
    %c0_i32 = arith.constant 0 : i32
    %c0_i32_0 = arith.constant 0 : i32
    return %arg0, %c0_i32, %arg1 : i32, i32, i32
  }
  func.func @transform_5(%arg0: i32, %arg1: i32) -> (i32, i32, i32) {
    %c0_i32 = arith.constant 0 : i32
    %c0_i32_0 = arith.constant 0 : i32
    return %arg0, %c0_i32, %arg1 : i32, i32, i32
  }
  func.func @transform_6(%arg0: i32, %arg1: i32) -> (i32, i32, i32) {
    %c0_i32 = arith.constant 0 : i32
    %c0_i32_0 = arith.constant 0 : i32
    return %arg0, %arg1, %c0_i32 : i32, i32, i32
  }
  func.func @transform_7(%arg0: i32, %arg1: i32) -> (i32, i32, i32) {
    %c0_i32 = arith.constant 0 : i32
    %c0_i32_0 = arith.constant 0 : i32
    %c0_i32_1 = arith.constant 0 : i32
    return %arg0, %c0_i32, %c0_i32_0 : i32, i32, i32
  }
  func.func @transform_8(%arg0: i32, %arg1: i32) -> (i32, i32) {
    %c0_i32 = arith.constant 0 : i32
    %c0_i32_0 = arith.constant 0 : i32
    %c0_i32_1 = arith.constant 0 : i32
    return %c0_i32, %c0_i32_0 : i32, i32
  }
}

module attributes {stable_mosaic.version = 11 : i64} {
  func.func @_moe_expert_kernel(%arg0: i32, %arg1: i32, %arg2: memref<1x16x1xi32, #tpu.memory_space<vmem>>, %arg3: memref<1x1x16xi32, #tpu.memory_space<vmem>>, %arg4: memref<1x16x1xf32, #tpu.memory_space<vmem>>, %arg5: memref<32x128xbf16, #tpu.memory_space<vmem>>, %arg6: memref<1x128x256xbf16, #tpu.memory_space<vmem>>, %arg7: memref<1x1x256xf32, #tpu.memory_space<vmem>>, %arg8: memref<1x256x128xbf16, #tpu.memory_space<vmem>>, %arg9: memref<1x1x128xf32, #tpu.memory_space<vmem>>, %arg10: memref<32x128xf32, #tpu.memory_space<vmem>>, %arg11: memref<16x128xbf16, #tpu.memory_space<vmem>>, %arg12: memref<16x128xf32, #tpu.memory_space<vmem>>) attributes {dimension_semantics = [#tpu.dimension_semantics<arbitrary>, #tpu.dimension_semantics<arbitrary>], iteration_bounds = array<i64: 4, 1>, scalar_prefetch = 0 : i64, scratch_operands = 2 : i64, tpu.core_type = #tpu.core_type<tc>, window_params = [{transform_indices = @transform_0, window_bounds = array<i64: 1, 16, 1>}, {transform_indices = @transform_1, window_bounds = array<i64: 1, 1, 16>}, {transform_indices = @transform_2, window_bounds = array<i64: 1, 16, 1>}, {pipeline_mode = #tpu.pipeline_mode<synchronous>, transform_indices = @transform_3, window_bounds = array<i64: 32, 128>}, {transform_indices = @transform_4, window_bounds = array<i64: 1, 128, 256>}, {transform_indices = @transform_5, window_bounds = array<i64: 1, 1, 256>}, {transform_indices = @transform_6, window_bounds = array<i64: 1, 256, 128>}, {transform_indices = @transform_7, window_bounds = array<i64: 1, 1, 128>}, {pipeline_mode = #tpu.pipeline_mode<synchronous>, transform_indices = @transform_8, window_bounds = array<i64: 32, 128>}]} {
    %c0_i32 = arith.constant 0 : i32
    %0 = arith.cmpi eq, %arg0, %c0_i32 : i32
    %c0_i32_0 = arith.constant 0 : i32
    %1 = arith.cmpi eq, %arg1, %c0_i32_0 : i32
    %2 = arith.andi %0, %1 : i1
    %3 = arith.extui %2 : i1 to i32
    %c0_i32_1 = arith.constant 0 : i32
    %4 = arith.cmpi ne, %3, %c0_i32_1 : i32
    scf.if %4 {
      %cst_22 = arith.constant 0.000000e+00 : f32
      %28 = vector.broadcast %cst_22 : f32 to vector<32x128xf32>
      %c0_23 = arith.constant 0 : index
      %c0_24 = arith.constant 0 : index
      %29 = vector.load %arg10[%c0_23, %c0_24] : memref<32x128xf32, #tpu.memory_space<vmem>>, vector<32x128xf32>
      tpu.vector_store %arg10[%c0_23, %c0_24], %28 {strides = array<i32>} : memref<32x128xf32, #tpu.memory_space<vmem>>, vector<32x128xf32>,
    } else {
    }
    %c0_i32_2 = arith.constant 0 : i32
    %5 = arith.cmpi eq, %arg1, %c0_i32_2 : i32
    %6 = arith.extui %5 : i1 to i32
    %c0_i32_3 = arith.constant 0 : i32
    %7 = arith.cmpi ne, %6, %c0_i32_3 : i32
    scf.if %7 {
      %28 = tpu.iota {dimensions = array<i32: 1>} : vector<16x32xi32>
      %c0_22 = arith.constant 0 : index
      %c0_23 = arith.constant 0 : index
      %c0_24 = arith.constant 0 : index
      %29 = vector.load %arg2[%c0_22, %c0_23, %c0_24] : memref<1x16x1xi32, #tpu.memory_space<vmem>>, vector<1x16x1xi32>
      %30 = vector.shape_cast %29 : vector<1x16x1xi32> to vector<16x1xi32>
      %31 = vector.broadcast %30 : vector<16x1xi32> to vector<16x32xi32>
      %32 = arith.cmpi eq, %28, %31 : vector<16x32xi32>
      %cst_25 = arith.constant 1.000000e+00 : f32
      %cst_26 = arith.constant 0.000000e+00 : f32
      %33 = vector.broadcast %cst_25 : f32 to vector<16x32xf32>
      %34 = vector.broadcast %cst_26 : f32 to vector<16x32xf32>
      %35 = arith.select %32, %33, %34 : vector<16x32xi1>, vector<16x32xf32>
      %36 = arith.truncf %35 : vector<16x32xf32> to vector<16x32xbf16>
      %c0_27 = arith.constant 0 : index
      %c0_28 = arith.constant 0 : index
      %37 = vector.load %arg5[%c0_27, %c0_28] : memref<32x128xbf16, #tpu.memory_space<vmem>>, vector<32x128xbf16>
      %cst_29 = arith.constant dense<0.000000e+00> : vector<16x128xf32>
      %38 = tpu.matmul %36, %37, %cst_29 {dimension_numbers = #tpu.dot_dimension_numbers<[1], [0], [0], [1], [0, 0, 1, 1], [], []>} : vector<16x32xbf16>, vector<32x128xbf16>, vector<16x128xf32> -> vector<16x128xf32>
      %39 = arith.truncf %38 : vector<16x128xf32> to vector<16x128xbf16>
      %c0_30 = arith.constant 0 : index
      %c0_31 = arith.constant 0 : index
      %40 = vector.load %arg11[%c0_30, %c0_31] : memref<16x128xbf16, #tpu.memory_space<vmem>>, vector<16x128xbf16>
      tpu.vector_store %arg11[%c0_30, %c0_31], %39 {strides = array<i32>} : memref<16x128xbf16, #tpu.memory_space<vmem>>, vector<16x128xbf16>,
      %cst_32 = arith.constant 0.000000e+00 : f32
      %41 = vector.broadcast %cst_32 : f32 to vector<16x128xf32>
      %c0_33 = arith.constant 0 : index
      %c0_34 = arith.constant 0 : index
      %42 = vector.load %arg12[%c0_33, %c0_34] : memref<16x128xf32, #tpu.memory_space<vmem>>, vector<16x128xf32>
      tpu.vector_store %arg12[%c0_33, %c0_34], %41 {strides = array<i32>} : memref<16x128xf32, #tpu.memory_space<vmem>>, vector<16x128xf32>,
    } else {
    }
    %c0 = arith.constant 0 : index
    %c0_4 = arith.constant 0 : index
    %8 = vector.load %arg11[%c0, %c0_4] : memref<16x128xbf16, #tpu.memory_space<vmem>>, vector<16x128xbf16>
    %c0_5 = arith.constant 0 : index
    %c0_6 = arith.constant 0 : index
    %c0_7 = arith.constant 0 : index
    %9 = vector.load %arg6[%c0_5, %c0_6, %c0_7] : memref<1x128x256xbf16, #tpu.memory_space<vmem>>, vector<1x128x256xbf16>
    %10 = vector.shape_cast %9 : vector<1x128x256xbf16> to vector<128x256xbf16>
    %cst = arith.constant dense<0.000000e+00> : vector<16x256xf32>
    %11 = tpu.matmul %8, %10, %cst {dimension_numbers = #tpu.dot_dimension_numbers<[1], [0], [0], [1], [0, 0, 1, 1], [], []>} : vector<16x128xbf16>, vector<128x256xbf16>, vector<16x256xf32> -> vector<16x256xf32>
    %c0_8 = arith.constant 0 : index
    %c0_9 = arith.constant 0 : index
    %c0_10 = arith.constant 0 : index
    %12 = vector.load %arg7[%c0_8, %c0_9, %c0_10] : memref<1x1x256xf32, #tpu.memory_space<vmem>>, vector<1x1x256xf32>
    %13 = vector.shape_cast %12 : vector<1x1x256xf32> to vector<1x256xf32>
    %14 = vector.broadcast %13 : vector<1x256xf32> to vector<16x256xf32>
    %15 = arith.addf %11, %14 : vector<16x256xf32>
    %cst_11 = arith.constant 0.000000e+00 : f32
    %16 = vector.broadcast %cst_11 : f32 to vector<16x256xf32>
    %17 = arith.maximumf %15, %16 : vector<16x256xf32>
    %c0_12 = arith.constant 0 : index
    %c0_13 = arith.constant 0 : index
    %18 = vector.load %arg12[%c0_12, %c0_13] : memref<16x128xf32, #tpu.memory_space<vmem>>, vector<16x128xf32>
    %19 = arith.truncf %17 : vector<16x256xf32> to vector<16x256xbf16>
    %c0_14 = arith.constant 0 : index
    %c0_15 = arith.constant 0 : index
    %c0_16 = arith.constant 0 : index
    %20 = vector.load %arg8[%c0_14, %c0_15, %c0_16] : memref<1x256x128xbf16, #tpu.memory_space<vmem>>, vector<1x256x128xbf16>
    %21 = vector.shape_cast %20 : vector<1x256x128xbf16> to vector<256x128xbf16>
    %cst_17 = arith.constant dense<0.000000e+00> : vector<16x128xf32>
    %22 = tpu.matmul %19, %21, %cst_17 {dimension_numbers = #tpu.dot_dimension_numbers<[1], [0], [0], [1], [0, 0, 1, 1], [], []>} : vector<16x256xbf16>, vector<256x128xbf16>, vector<16x128xf32> -> vector<16x128xf32>
    %23 = arith.addf %18, %22 : vector<16x128xf32>
    %c0_18 = arith.constant 0 : index
    %c0_19 = arith.constant 0 : index
    %24 = vector.load %arg12[%c0_18, %c0_19] : memref<16x128xf32, #tpu.memory_space<vmem>>, vector<16x128xf32>
    tpu.vector_store %arg12[%c0_18, %c0_19], %23 {strides = array<i32>} : memref<16x128xf32, #tpu.memory_space<vmem>>, vector<16x128xf32>,
    %c0_i32_20 = arith.constant 0 : i32
    %25 = arith.cmpi eq, %arg1, %c0_i32_20 : i32
    %26 = arith.extui %25 : i1 to i32
    %c0_i32_21 = arith.constant 0 : i32
    %27 = arith.cmpi ne, %26, %c0_i32_21 : i32
    scf.if %27 {
      %c0_22 = arith.constant 0 : index
      %c0_23 = arith.constant 0 : index
      %28 = vector.load %arg12[%c0_22, %c0_23] : memref<16x128xf32, #tpu.memory_space<vmem>>, vector<16x128xf32>
      %c0_24 = arith.constant 0 : index
      %c0_25 = arith.constant 0 : index
      %c0_26 = arith.constant 0 : index
      %29 = vector.load %arg9[%c0_24, %c0_25, %c0_26] : memref<1x1x128xf32, #tpu.memory_space<vmem>>, vector<1x1x128xf32>
      %30 = vector.shape_cast %29 : vector<1x1x128xf32> to vector<1x128xf32>
      %31 = vector.broadcast %30 : vector<1x128xf32> to vector<16x128xf32>
      %32 = arith.addf %28, %31 : vector<16x128xf32>
      %c0_27 = arith.constant 0 : index
      %c0_28 = arith.constant 0 : index
      %c0_29 = arith.constant 0 : index
      %33 = vector.load %arg4[%c0_27, %c0_28, %c0_29] : memref<1x16x1xf32, #tpu.memory_space<vmem>>, vector<1x16x1xf32>
      %34 = vector.shape_cast %33 : vector<1x16x1xf32> to vector<16x1xf32>
      %35 = vector.broadcast %34 : vector<16x1xf32> to vector<16x128xf32>
      %36 = arith.mulf %32, %35 : vector<16x128xf32>
      %37 = tpu.iota {dimensions = array<i32: 0>} : vector<32x16xi32>
      %c0_30 = arith.constant 0 : index
      %c0_31 = arith.constant 0 : index
      %c0_32 = arith.constant 0 : index
      %38 = vector.load %arg3[%c0_30, %c0_31, %c0_32] : memref<1x1x16xi32, #tpu.memory_space<vmem>>, vector<1x1x16xi32>
      %39 = vector.shape_cast %38 : vector<1x1x16xi32> to vector<1x16xi32>
      %40 = vector.broadcast %39 : vector<1x16xi32> to vector<32x16xi32>
      %41 = arith.cmpi eq, %37, %40 : vector<32x16xi32>
      %cst_33 = arith.constant 1.000000e+00 : f32
      %cst_34 = arith.constant 0.000000e+00 : f32
      %42 = vector.broadcast %cst_33 : f32 to vector<32x16xf32>
      %43 = vector.broadcast %cst_34 : f32 to vector<32x16xf32>
      %44 = arith.select %41, %42, %43 : vector<32x16xi1>, vector<32x16xf32>
      %c0_35 = arith.constant 0 : index
      %c0_36 = arith.constant 0 : index
      %45 = vector.load %arg10[%c0_35, %c0_36] : memref<32x128xf32, #tpu.memory_space<vmem>>, vector<32x128xf32>
      %cst_37 = arith.constant dense<0.000000e+00> : vector<32x128xf32>
      %46 = tpu.matmul %44, %36, %cst_37 {dimension_numbers = #tpu.dot_dimension_numbers<[1], [0], [0], [1], [0, 0, 1, 1], [], []>} : vector<32x16xf32>, vector<16x128xf32>, vector<32x128xf32> -> vector<32x128xf32>
      %47 = arith.addf %45, %46 : vector<32x128xf32>
      %c0_38 = arith.constant 0 : index
      %c0_39 = arith.constant 0 : index
      %48 = vector.load %arg10[%c0_38, %c0_39] : memref<32x128xf32, #tpu.memory_space<vmem>>, vector<32x128xf32>
      tpu.vector_store %arg10[%c0_38, %c0_39], %47 {strides = array<i32>} : memref<32x128xf32, #tpu.memory_space<vmem>>, vector<32x128xf32>,
    } else {
    }
    return
  }
  func.func @transform_0(%arg0: i32, %arg1: i32) -> (i32, i32, i32) {
    %c0_i32 = arith.constant 0 : i32
    %c0_i32_0 = arith.constant 0 : i32
    %c0_i32_1 = arith.constant 0 : i32
    return %arg0, %c0_i32, %c0_i32_0 : i32, i32, i32
  }
  func.func @transform_1(%arg0: i32, %arg1: i32) -> (i32, i32, i32) {
    %c0_i32 = arith.constant 0 : i32
    %c0_i32_0 = arith.constant 0 : i32
    %c0_i32_1 = arith.constant 0 : i32
    return %arg0, %c0_i32, %c0_i32_0 : i32, i32, i32
  }
  func.func @transform_2(%arg0: i32, %arg1: i32) -> (i32, i32, i32) {
    %c0_i32 = arith.constant 0 : i32
    %c0_i32_0 = arith.constant 0 : i32
    %c0_i32_1 = arith.constant 0 : i32
    return %arg0, %c0_i32, %c0_i32_0 : i32, i32, i32
  }
  func.func @transform_3(%arg0: i32, %arg1: i32) -> (i32, i32) {
    %c0_i32 = arith.constant 0 : i32
    %c0_i32_0 = arith.constant 0 : i32
    %c0_i32_1 = arith.constant 0 : i32
    return %c0_i32, %c0_i32_0 : i32, i32
  }
  func.func @transform_4(%arg0: i32, %arg1: i32) -> (i32, i32, i32) {
    %c0_i32 = arith.constant 0 : i32
    %c0_i32_0 = arith.constant 0 : i32
    return %arg0, %c0_i32, %arg1 : i32, i32, i32
  }
  func.func @transform_5(%arg0: i32, %arg1: i32) -> (i32, i32, i32) {
    %c0_i32 = arith.constant 0 : i32
    %c0_i32_0 = arith.constant 0 : i32
    return %arg0, %c0_i32, %arg1 : i32, i32, i32
  }
  func.func @transform_6(%arg0: i32, %arg1: i32) -> (i32, i32, i32) {
    %c0_i32 = arith.constant 0 : i32
    %c0_i32_0 = arith.constant 0 : i32
    return %arg0, %arg1, %c0_i32 : i32, i32, i32
  }
  func.func @transform_7(%arg0: i32, %arg1: i32) -> (i32, i32, i32) {
    %c0_i32 = arith.constant 0 : i32
    %c0_i32_0 = arith.constant 0 : i32
    %c0_i32_1 = arith.constant 0 : i32
    return %arg0, %c0_i32, %c0_i32_0 : i32, i32, i32
  }
  func.func @transform_8(%arg0: i32, %arg1: i32) -> (i32, i32) {
    %c0_i32 = arith.constant 0 : i32
    %c0_i32_0 = arith.constant 0 : i32
    %c0_i32_1 = arith.constant 0 : i32
    return %c0_i32, %c0_i32_0 : i32, i32
  }
}

</mosaic_0001>

<llo_original>
// kernel: tpu_custom_call.1
$region0: #{tpu_custom_call.1}
  #allocation0 [shape = 'u32[]', space=smem, size = 0x4, offset = 0x4, fixed_abs, tag = 'smem constant byte address 0x4 - core index']
  #allocation1 [shape = 'u32[72,128]{1,0:T(1,128)}', space=vmem, size = 0x9000, scoped, tag = 'internal scratch']
  #allocation2 [shape = 'bf16[16,128]{1,0:T(8,128)(2,1)}', space=vmem, size = 0x1000, scoped, tag = 'scratch operand']
  #allocation3 [shape = 'f32[16,128]{1,0:T(8,128)}', space=vmem, size = 0x2000, scoped, tag = 'scratch operand']
  %s0 = inlined_call_operand.vmem [shape: s32[4,16,1], index: 0, kind: input, shape index: {}]
  %s1 = inlined_call_operand.vmem [shape: s32[4,1,16], index: 1, kind: input, shape index: {}]
  %s2 = inlined_call_operand.vmem [shape: f32[4,16,1], index: 2, kind: input, shape index: {}]
  %s3 = inlined_call_operand.vmem [shape: bf16[32,128], index: 3, kind: input, shape index: {}]
  %s4 = inlined_call_operand.hbm [shape: bf16[4,128,256], index: 4, kind: input, shape index: {}]
  %s5 = inlined_call_operand.vmem [shape: f32[4,1,256], index: 5, kind: input, shape index: {}]
  %s6 = inlined_call_operand.hbm [shape: bf16[4,256,128], index: 6, kind: input, shape index: {}]
  %s7 = inlined_call_operand.vmem [shape: f32[4,1,128], index: 7, kind: input, shape index: {}]
  %s8 = inlined_call_operand.hbm [shape: f32[32,128], index: 8, kind: output, shape index: {}]
  %s9 = sld [smem:[#allocation0]]
  $region85: #{tpu_custom_call.1} parent=0
    _
  %s11 = ssub.s32 1, %s9
  %s12 = scalar_select 0, %s11, %s9
  $region1: #{tpu_custom_call.1} parent=0
    #allocation4 [shape = 'u8[131072]{0}', space=vmem, size = 0x20000, scoped, tag = 'input window, operand 4']
    #allocation5 [shape = 's32[2]{0}', space=sflag, size = 0x8, scoped, tag = 'scoped memory for tpu_custom_call.1']
    #allocation6 [shape = 's32[2]{0}', space=sflag, size = 0x8, scoped, tag = 'scoped memory for tpu_custom_call.1']
    #allocation7 [shape = 'u8[131072]{0}', space=vmem, size = 0x20000, scoped, tag = 'input window, operand 6']
    #allocation8 [shape = 's32[2]{0}', space=sflag, size = 0x8, scoped, tag = 'scoped memory for tpu_custom_call.1']
    #allocation9 [shape = 'u8[16384]{0}', space=vmem, size = 0x4000, scoped, tag = 'output window, operand 0, single buffered']
    %13 = vsyncpa [#allocation5], 0
    %s14 = scalar_lea.sflag [#allocation5], 1
    %15 = vsyncpa %s14, 0
    %16 = vsyncpa [#allocation8], 0
    %s17 = scalar_lea.sflag [#allocation8], 1
    %18 = vsyncpa %s17, 0
    %19 = vsyncpa [#allocation6], 0
    loop: start=0, step=1, limit=6
    $region2: #{tpu_custom_call.1} parent=1 // loop_pre_header
      _
    $region3: #{tpu_custom_call.1} parent=1 // loop_header
      %s21 = sphi 0, %s25
      %p22 = scmp.ge.s32.totalorder %s21, 6
      %s28 = sphi 0, %s40
      %s29 = sphi 0, %s36
      %s30 = sphi 0, %s28
      %s31 = sphi 0, %s29
      %s32 = sphi 0, %s30
      %s33 = sphi 0, %s31
      %s43 = sphi 0, %s45
      %s46 = sphi 0, %s43
      %s47 = sphi 0, %s46
      %s63 = sphi 0, %s47
      %s69 = sphi 0, %s71
      %s72 = sphi 0, %s69
      %s73 = sphi 0, %s72
      %s89 = sphi 0, %s73
      %s95 = sphi 0, %s97
      %s98 = sphi 0, %s95
      %s99 = sphi 0, %s98
      %s115 = sphi 0, %s99
      %s119 = sphi 0, %s119
      %s121 = sphi 0, %s119
      %s122 = sphi 0, %s121
      %s136 = sphi 0, %s122
      %s144 = sphi 0, %s146
      %s147 = sphi 0, %s144
      %s148 = sphi 0, %s147
      %s164 = sphi 0, %s148
      %s172 = sphi 0, %s174
      %s175 = sphi 0, %s172
      %s176 = sphi 0, %s175
      %s192 = sphi 0, %s176
      %s200 = sphi 0, %s202
      %s203 = sphi 0, %s200
      %s204 = sphi 0, %s203
      %s220 = sphi 0, %s204
      %s226 = sphi 0, %s228
      %s229 = sphi 0, %s226
      %s230 = sphi 0, %s229
      %s246 = sphi 0, %s230
      %s250 = sphi 0, %s250
      %s252 = sphi 0, %s250
      %s253 = sphi 0, %s252
      %s267 = sphi 0, %s253
    $region4: #{tpu_custom_call.1} parent=1 // loop_header_branch
      %24 = sbr.rel (%p22) target = $region8
    $region5: #{tpu_custom_call.1} parent=1 // loop_body
      %s26 = ssub.s32 %s21, 1
      %s27 = ssub.s32 %s21, 2
      %s34 = sadd.s32 1, %s29
      %p35 = scmp.ge.s32.totalorder %s34, 1
      %s36 = scalar_select %p35, 0, %s34
      %s37 = sadd.s32 1, %s28
      %s38 = scalar_select %p35, %s37, %s28
      %p39 = scmp.ge.s32.totalorder %s38, 4
      %s40 = scalar_select %p39, 0, %s38
      %s41 = ssub.s32 %s28, %s40
      %p42 = scmp.eq.s32.totalorder %s41, 0
      %s44 = sadd.s32 %s43, 1
      %s45 = scalar_select %p42, %s43, %s44
      %p48 = pneg %p42
      %p49 = scmp.eq.s32.totalorder %s21, 3
      %p50 = por %p48, %p49
      %p51 = scmp.ne.s32.totalorder %s43, %s46
      %p52 = scmp.eq.s32.totalorder %s21, 0
      %p53 = por %p51, %p52
      %p54 = scmp.ne.s32.totalorder %s43, %s46
      %p55 = scmp.eq.s32.totalorder %s26, 3
      %p56 = por %p54, %p55
      %p57 = scmp.ne.s32.totalorder %s46, %s47
      %p58 = scmp.eq.s32.totalorder %s26, 0
      %p59 = por %p57, %p58
      %p60 = scmp.ne.s32.totalorder %s46, %s47
      %p61 = scmp.eq.s32.totalorder %s27, 3
      %p62 = por %p60, %p61
      %p64 = scmp.ne.s32.totalorder %s47, %s63
      %p65 = scmp.eq.s32.totalorder %s27, 0
      %p66 = por %p64, %p65
      %s67 = ssub.s32 %s28, %s40
      %p68 = scmp.eq.s32.totalorder %s67, 0
      %s70 = sadd.s32 %s69, 1
      %s71 = scalar_select %p68, %s69, %s70
      %p74 = pneg %p68
      %p75 = scmp.eq.s32.totalorder %s21, 3
      %p76 = por %p74, %p75
      %p77 = scmp.ne.s32.totalorder %s69, %s72
      %p78 = scmp.eq.s32.totalorder %s21, 0
      %p79 = por %p77, %p78
      %p80 = scmp.ne.s32.totalorder %s69, %s72
      %p81 = scmp.eq.s32.totalorder %s26, 3
      %p82 = por %p80, %p81
      %p83 = scmp.ne.s32.totalorder %s72, %s73
      %p84 = scmp.eq.s32.totalorder %s26, 0
      %p85 = por %p83, %p84
      %p86 = scmp.ne.s32.totalorder %s72, %s73
      %p87 = scmp.eq.s32.totalorder %s27, 3
      %p88 = por %p86, %p87
      %p90 = scmp.ne.s32.totalorder %s73, %s89
      %p91 = scmp.eq.s32.totalorder %s27, 0
      %p92 = por %p90, %p91
      %s93 = ssub.s32 %s28, %s40
      %p94 = scmp.eq.s32.totalorder %s93, 0
      %s96 = sadd.s32 %s95, 1
      %s97 = scalar_select %p94, %s95, %s96
      %p100 = pneg %p94
      %p101 = scmp.eq.s32.totalorder %s21, 3
      %p102 = por %p100, %p101
      %p103 = scmp.ne.s32.totalorder %s95, %s98
      %p104 = scmp.eq.s32.totalorder %s21, 0
      %p105 = por %p103, %p104
      %p106 = scmp.ne.s32.totalorder %s95, %s98
      %p107 = scmp.eq.s32.totalorder %s26, 3
      %p108 = por %p106, %p107
      %p109 = scmp.ne.s32.totalorder %s98, %s99
      %p110 = scmp.eq.s32.totalorder %s26, 0
      %p111 = por %p109, %p110
      %p112 = scmp.ne.s32.totalorder %s98, %s99
      %p113 = scmp.eq.s32.totalorder %s27, 3
      %p114 = por %p112, %p113
      %p116 = scmp.ne.s32.totalorder %s99, %s115
      %p117 = scmp.eq.s32.totalorder %s27, 0
      %p118 = por %p116, %p117
      %s120 = sadd.s32 %s119, 1
      %p123 = scmp.eq.s32.totalorder %s21, 3
      %p124 = scmp.ne.s32.totalorder %s119, %s121
      %p125 = scmp.eq.s32.totalorder %s21, 0
      %p126 = por %p124, %p125
      %p127 = scmp.ne.s32.totalorder %s119, %s121
      %p128 = scmp.eq.s32.totalorder %s26, 3
      %p129 = por %p127, %p128
      %p130 = scmp.ne.s32.totalorder %s121, %s122
      %p131 = scmp.eq.s32.totalorder %s26, 0
      %p132 = por %p130, %p131
      %p133 = scmp.ne.s32.totalorder %s121, %s122
      %p134 = scmp.eq.s32.totalorder %s27, 3
      %p135 = por %p133, %p134
      %p137 = scmp.ne.s32.totalorder %s122, %s136
      %p138 = scmp.eq.s32.totalorder %s27, 0
      %p139 = por %p137, %p138
      %s140 = ssub.s32 %s28, %s40
      %s141 = ssub.s32 %s29, %s36
      %s142 = sor.u32 %s140, %s141
      %p143 = scmp.eq.s32.totalorder %s142, 0
      %s145 = sadd.s32 %s144, 1
      %s146 = scalar_select %p143, %s144, %s145
      %p149 = pneg %p143
      %p150 = scmp.eq.s32.totalorder %s21, 3
      %p151 = por %p149, %p150
      %p152 = scmp.ne.s32.totalorder %s144, %s147
      %p153 = scmp.eq.s32.totalorder %s21, 0
      %p154 = por %p152, %p153
      %p155 = scmp.ne.s32.totalorder %s144, %s147
      %p156 = scmp.eq.s32.totalorder %s26, 3
      %p157 = por %p155, %p156
      %p158 = scmp.ne.s32.totalorder %s147, %s148
      %p159 = scmp.eq.s32.totalorder %s26, 0
      %p160 = por %p158, %p159
      %p161 = scmp.ne.s32.totalorder %s147, %s148
      %p162 = scmp.eq.s32.totalorder %s27, 3
      %p163 = por %p161, %p162
      %p165 = scmp.ne.s32.totalorder %s148, %s164
      %p166 = scmp.eq.s32.totalorder %s27, 0
      %p167 = por %p165, %p166
      %s168 = ssub.s32 %s28, %s40
      %s169 = ssub.s32 %s29, %s36
      %s170 = sor.u32 %s168, %s169
      %p171 = scmp.eq.s32.totalorder %s170, 0
      %s173 = sadd.s32 %s172, 1
      %s174 = scalar_select %p171, %s172, %s173
      %p177 = pneg %p171
      %p178 = scmp.eq.s32.totalorder %s21, 3
      %p179 = por %p177, %p178
      %p180 = scmp.ne.s32.totalorder %s172, %s175
      %p181 = scmp.eq.s32.totalorder %s21, 0
      %p182 = por %p180, %p181
      %p183 = scmp.ne.s32.totalorder %s172, %s175
      %p184 = scmp.eq.s32.totalorder %s26, 3
      %p185 = por %p183, %p184
      %p186 = scmp.ne.s32.totalorder %s175, %s176
      %p187 = scmp.eq.s32.totalorder %s26, 0
      %p188 = por %p186, %p187
      %p189 = scmp.ne.s32.totalorder %s175, %s176
      %p190 = scmp.eq.s32.totalorder %s27, 3
      %p191 = por %p189, %p190
      %p193 = scmp.ne.s32.totalorder %s176, %s192
      %p194 = scmp.eq.s32.totalorder %s27, 0
      %p195 = por %p193, %p194
      %s196 = ssub.s32 %s28, %s40
      %s197 = ssub.s32 %s29, %s36
      %s198 = sor.u32 %s196, %s197
      %p199 = scmp.eq.s32.totalorder %s198, 0
      %s201 = sadd.s32 %s200, 1
      %s202 = scalar_select %p199, %s200, %s201
      %p205 = pneg %p199
      %p206 = scmp.eq.s32.totalorder %s21, 3
      %p207 = por %p205, %p206
      %p208 = scmp.ne.s32.totalorder %s200, %s203
      %p209 = scmp.eq.s32.totalorder %s21, 0
      %p210 = por %p208, %p209
      %p211 = scmp.ne.s32.totalorder %s200, %s203
      %p212 = scmp.eq.s32.totalorder %s26, 3
      %p213 = por %p211, %p212
      %p214 = scmp.ne.s32.totalorder %s203, %s204
      %p215 = scmp.eq.s32.totalorder %s26, 0
      %p216 = por %p214, %p215
      %p217 = scmp.ne.s32.totalorder %s203, %s204
      %p218 = scmp.eq.s32.totalorder %s27, 3
      %p219 = por %p217, %p218
      %p221 = scmp.ne.s32.totalorder %s204, %s220
      %p222 = scmp.eq.s32.totalorder %s27, 0
      %p223 = por %p221, %p222
      %s224 = ssub.s32 %s28, %s40
      %p225 = scmp.eq.s32.totalorder %s224, 0
      %s227 = sadd.s32 %s226, 1
      %s228 = scalar_select %p225, %s226, %s227
      %p231 = pneg %p225
      %p232 = scmp.eq.s32.totalorder %s21, 3
      %p233 = por %p231, %p232
      %p234 = scmp.ne.s32.totalorder %s226, %s229
      %p235 = scmp.eq.s32.totalorder %s21, 0
      %p236 = por %p234, %p235
      %p237 = scmp.ne.s32.totalorder %s226, %s229
      %p238 = scmp.eq.s32.totalorder %s26, 3
      %p239 = por %p237, %p238
      %p240 = scmp.ne.s32.totalorder %s229, %s230
      %p241 = scmp.eq.s32.totalorder %s26, 0
      %p242 = por %p240, %p241
      %p243 = scmp.ne.s32.totalorder %s229, %s230
      %p244 = scmp.eq.s32.totalorder %s27, 3
      %p245 = por %p243, %p244
      %p247 = scmp.ne.s32.totalorder %s230, %s246
      %p248 = scmp.eq.s32.totalorder %s27, 0
      %p249 = por %p247, %p248
      %s251 = sadd.s32 %s250, 1
      %p254 = scmp.eq.s32.totalorder %s21, 3
      %p255 = scmp.ne.s32.totalorder %s250, %s252
      %p256 = scmp.eq.s32.totalorder %s21, 0
      %p257 = por %p255, %p256
      %p258 = scmp.ne.s32.totalorder %s250, %s252
      %p259 = scmp.eq.s32.totalorder %s26, 3
      %p260 = por %p258, %p259
      %p261 = scmp.ne.s32.totalorder %s252, %s253
      %p262 = scmp.eq.s32.totalorder %s26, 0
      %p263 = por %p261, %p262
      %p264 = scmp.ne.s32.totalorder %s252, %s253
      %p265 = scmp.eq.s32.totalorder %s27, 3
      %p266 = por %p264, %p265
      %p268 = scmp.ne.s32.totalorder %s253, %s267
      %p269 = scmp.eq.s32.totalorder %s27, 0
      %p270 = por %p268, %p269
      %p271 = scmp.le.s32.totalorder 1, %s21
      %p272 = scmp.lt.s32.totalorder %s21, 5
      %p273 = pnand %p271, %p272
      %p274 = pneg %p273
      // Predicated region
      $region9: #{tpu_custom_call.1} parent=5 // pred_check
        _
      $region10: #{tpu_custom_call.1} parent=5 // pred_check_branch
        %276 = sbr.rel (%p273) target = $region12
      $region11: #{tpu_custom_call.1} parent=5 // pred_region
        %s277 = ssub.s32 %s21, 1
        // Predicated region
        $region13: #{tpu_custom_call.1} parent=11 // pred_check
          %p278 = pneg %p132
        $region14: #{tpu_custom_call.1} parent=11 // pred_check_branch
          %280 = sbr.rel (%p278) target = $region16
        $region15: #{tpu_custom_call.1} parent=11 // pred_region
          _
        $region16: #{tpu_custom_call.1} parent=11 // pred_fallthru
          _
      $region12: #{tpu_custom_call.1} parent=5 // pred_fallthru
        _
      %p281 = scmp.lt.s32.totalorder %s21, 4
      // Predicated region
      $region17: #{tpu_custom_call.1} parent=5 // pred_check
        %p282 = pneg %p281
      $region18: #{tpu_custom_call.1} parent=5 // pred_check_branch
        %284 = sbr.rel (%p282) target = $region20
      $region19: #{tpu_custom_call.1} parent=5 // pred_region
        // Predicated region
        $region21: #{tpu_custom_call.1} parent=19 // pred_check
          %p285 = pneg %p53
        $region22: #{tpu_custom_call.1} parent=19 // pred_check_branch
          %287 = sbr.rel (%p285) target = $region24
        $region23: #{tpu_custom_call.1} parent=19 // pred_region
          %p288 = scmp.lt.s32.totalorder %s28, 3
          %s289 = scalar_select %p288, %s28, 3
          %s290 = smul.addr %s289, 2
          %s291 = smul.addr %s290, 8
          %s292 = scalar_lea.vmem %s0, %s291
        $region24: #{tpu_custom_call.1} parent=19 // pred_fallthru
          _
        // Predicated region
        $region25: #{tpu_custom_call.1} parent=19 // pred_check
          %p293 = pneg %p79
        $region26: #{tpu_custom_call.1} parent=19 // pred_check_branch
          %295 = sbr.rel (%p293) target = $region28
        $region27: #{tpu_custom_call.1} parent=19 // pred_region
          %p296 = scmp.lt.s32.totalorder %s28, 3
          %s297 = scalar_select %p296, %s28, 3
          %s298 = scalar_lea.vmem %s1, %s297
        $region28: #{tpu_custom_call.1} parent=19 // pred_fallthru
          _
        // Predicated region
        $region29: #{tpu_custom_call.1} parent=19 // pred_check
          %p299 = pneg %p105
        $region30: #{tpu_custom_call.1} parent=19 // pred_check_branch
          %301 = sbr.rel (%p299) target = $region32
        $region31: #{tpu_custom_call.1} parent=19 // pred_region
          %p302 = scmp.lt.s32.totalorder %s28, 3
          %s303 = scalar_select %p302, %s28, 3
          %s304 = smul.addr %s303, 2
          %s305 = smul.addr %s304, 8
          %s306 = scalar_lea.vmem %s2, %s305
        $region32: #{tpu_custom_call.1} parent=19 // pred_fallthru
          _
        // Predicated region
        $region33: #{tpu_custom_call.1} parent=19 // pred_check
          %p307 = pneg %p154
        $region34: #{tpu_custom_call.1} parent=19 // pred_check_branch
          %309 = sbr.rel (%p307) target = $region36
        $region35: #{tpu_custom_call.1} parent=19 // pred_region
          %s310 = sand.u32 %s144, 1
          %s311 = scalar_lea.sflag [#allocation5], %s310
          %s312 = sand.u32 %s144, 1
          %s313 = smul.addr %s312, 128
          %s314 = scalar_lea.vmem [#allocation4], %s313
          %s315 = smul.u32 2, %s29
          %317 = vsyncadd %s311, 0
          %s318 = smul.addr %s28, 32
          %s319 = sadd.s32 %s315, %s318
          %s320 = smul.addr %s319, 4
          %s321 = scalar_lea.hbm %s4, %s320
          %s322 = sshll.u32 %s321, 4
          %s323 = int_to_ptr.hbm [resolvable:$true] %s322
          %s324 = sshll.u32 %s314, 4
          %s325 = int_to_ptr.vmem [resolvable:$true] %s324
          %330 = dma.hbm_to_vmem [thread:$0]  %s323, 2048, %s325, %s311, 128, 128, 8
        $region36: #{tpu_custom_call.1} parent=19 // pred_fallthru
          _
        // Predicated region
        $region37: #{tpu_custom_call.1} parent=19 // pred_check
          %p331 = pneg %p182
        $region38: #{tpu_custom_call.1} parent=19 // pred_check_branch
          %333 = sbr.rel (%p331) target = $region40
        $region39: #{tpu_custom_call.1} parent=19 // pred_region
          %s334 = smul.u32 2, %s29
          %p335 = scmp.lt.s32.totalorder %s28, 3
          %s336 = scalar_select %p335, %s28, 3
          %p337 = scmp.lt.s32.totalorder %s334, 1
          %s338 = scalar_select %p337, %s334, 1
          %s339 = smul.addr %s336, 2
          %s340 = sadd.s32 %s338, %s339
          %s341 = scalar_lea.vmem %s5, %s340
          %s342 = smul.u32 2, %s29
        $region40: #{tpu_custom_call.1} parent=19 // pred_fallthru
          _
        // Predicated region
        $region41: #{tpu_custom_call.1} parent=19 // pred_check
          %p343 = pneg %p210
        $region42: #{tpu_custom_call.1} parent=19 // pred_check_branch
          %345 = sbr.rel (%p343) target = $region44
        $region43: #{tpu_custom_call.1} parent=19 // pred_region
          %s346 = sand.u32 %s200, 1
          %s347 = scalar_lea.sflag [#allocation8], %s346
          %s348 = sand.u32 %s200, 1
          %s349 = smul.addr %s348, 128
          %s350 = scalar_lea.vmem [#allocation7], %s349
          %s351 = smul.u32 32, %s29
          %353 = vsyncadd %s347, 0
          %s354 = smul.addr %s28, 32
          %s355 = sadd.s32 %s351, %s354
          %s356 = smul.addr %s355, 4
          %s357 = scalar_lea.hbm %s6, %s356
          %s358 = sshll.u32 %s357, 4
          %s359 = int_to_ptr.hbm [resolvable:$true] %s358
          %s360 = sshll.u32 %s350, 4
          %s361 = int_to_ptr.vmem [resolvable:$true] %s360
          %366 = dma.hbm_to_vmem [thread:$0]  %s359, 2048, %s361, %s347, 64, 64, 4
        $region44: #{tpu_custom_call.1} parent=19 // pred_fallthru
          _
        // Predicated region
        $region45: #{tpu_custom_call.1} parent=19 // pred_check
          %p367 = pneg %p236
        $region46: #{tpu_custom_call.1} parent=19 // pred_check_branch
          %369 = sbr.rel (%p367) target = $region48
        $region47: #{tpu_custom_call.1} parent=19 // pred_region
          %p370 = scmp.lt.s32.totalorder %s28, 3
          %s371 = scalar_select %p370, %s28, 3
          %s372 = scalar_lea.vmem %s7, %s371
        $region48: #{tpu_custom_call.1} parent=19 // pred_fallthru
          _
      $region20: #{tpu_custom_call.1} parent=5 // pred_fallthru
        _
      %p373 = scmp.le.s32.totalorder 1, %s21
      %p374 = scmp.lt.s32.totalorder %s21, 5
      %p375 = pnand %p373, %p374
      %p376 = pneg %p375
      // Predicated region
      $region49: #{tpu_custom_call.1} parent=5 // pred_check
        _
      $region50: #{tpu_custom_call.1} parent=5 // pred_check_branch
        %378 = sbr.rel (%p375) target = $region52
      $region51: #{tpu_custom_call.1} parent=5 // pred_region
        %s379 = ssub.s32 %s21, 1
        %s380 = sand.u32 %s147, 1
        %s381 = scalar_lea.sflag [#allocation5], %s380
        %s382 = sand.u32 %s147, 1
        %s383 = smul.addr %s382, 128
        %s384 = scalar_lea.vmem [#allocation4], %s383
        // Predicated region
        $region53: #{tpu_custom_call.1} parent=51 // pred_check
          %p385 = pneg %p160
        $region54: #{tpu_custom_call.1} parent=51 // pred_check_branch
          %387 = sbr.rel (%p385) target = $region56
        $region55: #{tpu_custom_call.1} parent=51 // pred_region
          %389 = dma.done %s381, 2048
        $region56: #{tpu_custom_call.1} parent=51 // pred_fallthru
          _
        %s390 = sand.u32 %s203, 1
        %s391 = scalar_lea.sflag [#allocation8], %s390
        %s392 = sand.u32 %s203, 1
        %s393 = smul.addr %s392, 128
        %s394 = scalar_lea.vmem [#allocation7], %s393
        // Predicated region
        $region57: #{tpu_custom_call.1} parent=51 // pred_check
          %p395 = pneg %p216
        $region58: #{tpu_custom_call.1} parent=51 // pred_check_branch
          %397 = sbr.rel (%p395) target = $region60
        $region59: #{tpu_custom_call.1} parent=51 // pred_region
          %399 = dma.done %s391, 2048
        $region60: #{tpu_custom_call.1} parent=51 // pred_fallthru
          _
        %p400 = scmp.lt.s32.totalorder %s30, 3
        %s401 = scalar_select %p400, %s30, 3
        %s402 = smul.addr %s401, 2
        %s403 = smul.addr %s402, 8
        %s404 = scalar_lea.vmem %s0, %s403
        %p405 = pneg %p59
        %p406 = pneg %p56
        %p407 = scmp.lt.s32.totalorder %s30, 3
        %s408 = scalar_select %p407, %s30, 3
        %s409 = scalar_lea.vmem %s1, %s408
        %p410 = pneg %p85
        %p411 = pneg %p82
        %p412 = scmp.lt.s32.totalorder %s30, 3
        %s413 = scalar_select %p412, %s30, 3
        %s414 = smul.addr %s413, 2
        %s415 = smul.addr %s414, 8
        %s416 = scalar_lea.vmem %s2, %s415
        %p417 = pneg %p111
        %p418 = pneg %p108
        %p419 = pneg %p132
        %p420 = pneg %p129
        %s421 = sand.u32 %s147, 1
        %s422 = scalar_lea.sflag [#allocation5], %s421
        %s423 = sand.u32 %s147, 1
        %s424 = smul.addr %s423, 128
        %s425 = scalar_lea.vmem [#allocation4], %s424
        %p426 = pneg %p160
        %p427 = pneg %p157
        %s428 = smul.u32 2, %s31
        %p429 = scmp.lt.s32.totalorder %s30, 3
        %s430 = scalar_select %p429, %s30, 3
        %p431 = scmp.lt.s32.totalorder %s428, 1
        %s432 = scalar_select %p431, %s428, 1
        %s433 = smul.addr %s430, 2
        %s434 = sadd.s32 %s432, %s433
        %s435 = scalar_lea.vmem %s5, %s434
        %p436 = pneg %p188
        %p437 = pneg %p185
        %s438 = sand.u32 %s203, 1
        %s439 = scalar_lea.sflag [#allocation8], %s438
        %s440 = sand.u32 %s203, 1
        %s441 = smul.addr %s440, 128
        %s442 = scalar_lea.vmem [#allocation7], %s441
        %p443 = pneg %p216
        %p444 = pneg %p213
        %p445 = scmp.lt.s32.totalorder %s30, 3
        %s446 = scalar_select %p445, %s30, 3
        %s447 = scalar_lea.vmem %s7, %s446
        %p448 = pneg %p242
        %p449 = pneg %p239
        %p450 = pneg %p263
        %p451 = pneg %p260
        %p452 = scmp.lt.s32.totalorder %s30, 3
        %s453 = scalar_select %p452, %s30, 3
        %s454 = smul.addr %s453, 2
        %s455 = smul.addr %s454, 8
        %s456 = scalar_lea.vmem %s0, %s455
        %p457 = scmp.lt.s32.totalorder %s30, 3
        %s458 = scalar_select %p457, %s30, 3
        %s459 = scalar_lea.vmem %s1, %s458
        %p460 = scmp.lt.s32.totalorder %s30, 3
        %s461 = scalar_select %p460, %s30, 3
        %s462 = smul.addr %s461, 2
        %s463 = smul.addr %s462, 8
        %s464 = scalar_lea.vmem %s2, %s463
        %s465 = smul.u32 2, %s31
        %s466 = smul.u32 2, %s31
        %p467 = scmp.lt.s32.totalorder %s30, 3
        %s468 = scalar_select %p467, %s30, 3
        %p469 = scmp.lt.s32.totalorder %s466, 1
        %s470 = scalar_select %p469, %s466, 1
        %s471 = smul.addr %s468, 2
        %s472 = sadd.s32 %s470, %s471
        %s473 = scalar_lea.vmem %s5, %s472
        %s474 = smul.u32 2, %s31
        %s475 = smul.u32 32, %s31
        %p476 = scmp.lt.s32.totalorder %s30, 3
        %s477 = scalar_select %p476, %s30, 3
        %s478 = scalar_lea.vmem %s7, %s477
        %p480 = scmp.eq.s32.totalorder %s30, 0
        %p481 = scmp.eq.s32.totalorder %s31, 0
        %p482 = pnand %p480, %p481
        %p483 = pneg %p482
        // Predicated region
        $region61: #{tpu_custom_call.1} parent=51 // pred_check
          _
        $region62: #{tpu_custom_call.1} parent=51 // pred_check_branch
          %485 = sbr.rel (%p482) target = $region64
        $region63: #{tpu_custom_call.1} parent=51 // pred_region
          %486 = vst [vmem:[#allocation9] sm:$0xff] 0.0
          %487 = vst [vmem:[#allocation9 + $0x8] sm:$0xff] 0.0
          %488 = vst [vmem:[#allocation9 + $0x10] sm:$0xff] 0.0
          %489 = vst [vmem:[#allocation9 + $0x18] sm:$0xff] 0.0
        $region64: #{tpu_custom_call.1} parent=51 // pred_fallthru
          _
        // Predicated region
        $region65: #{tpu_custom_call.1} parent=51 // pred_check
          %p490 = pneg %p481
        $region66: #{tpu_custom_call.1} parent=51 // pred_check_branch
          %492 = sbr.rel (%p490) target = $region68
        $region67: #{tpu_custom_call.1} parent=51 // pred_region
          %v493 = vlaneseq
          %v494 = vand.u32 %v493, 127
          %v495 = vld [vmem:[%s456] sm:$0xff]
          %v496 = vld [vmem:[%s456 + $0x8] sm:$0xff]
          %497 = vset.pattern.permute.xlu0 0
          %498 = vperm.xlu0 %497, %v495
          %v499 = vpop.permute.xlu0 %498
          %500 = vset.pattern.permute.xlu0 0
          %501 = vperm.xlu0 %500, %v496
          %v502 = vpop.permute.xlu0 %501
          %vm503 = vcmp.eq.s32.totalorder %v494, %v499
          %vm504 = vcmp.eq.s32.totalorder %v494, %v502
          %v505 = vsel %vm503, 1.0, 0.0
          %v506 = vsel %vm504, 1.0, 0.0
          %v507 = vpack.c.bf16 %v506, %v505
          %v508 = vld [vmem:[%s3] sm:$0xf]
          %v509 = vld [vmem:[%s3 + $0x4] sm:$0xf]
          %v510 = vld [vmem:[%s3 + $0x8] sm:$0xf]
          %v511 = vld [vmem:[%s3 + $0xc] sm:$0xf]
          %v516 = vunpack.c.l.b16 %v508
          %v517 = vunpack.c.l.b16 %v509
          %v518 = vunpack.c.l.b16 %v510
          %v519 = vunpack.c.l.b16 %v511
          %v520 = vpack.c.b16 %v517, %v516
          %v521 = vpack.c.b16 %v519, %v518
          %vm524 = vcmask 261120
          %v526 = vsel %vm524, %v507, 0
          %528 = vmatpush.bf16.msra.mxu0 0
          %529 = vmatpush.bf16.msra.mxu0 0
          %530 = vmatpush.bf16.msra.mxu0 0
          %531 = vmatpush.bf16.msra.mxu0 0
          %532 = vmatpush.bf16.msra.mxu0 0
          %533 = vmatpush.bf16.msra.mxu0 0
          %534 = vmatpush.bf16.msra.mxu0 %v521
          %535 = vmatpush.bf16.msra.mxu0 %v520
          %536 = vmatmul.bf16.gmra.mxu0 %v526
          %v537 = vpop.f32.mrf.mxu0
          %v538 = vadd.f32 0.0, %v537
          %v539 = vpop.f32.mrf.mxu0
          %v540 = vadd.f32 0.0, %v539
          %541 = vdwg.mxu0
          %v542 = vpack.c.bf16 %v538, %v538
          %v543 = vpack.c.bf16 %v540, %v540
          %544 = vst [vmem:[#allocation2] sm:$0xf] %v542
          %545 = vst [vmem:[#allocation2 + $0x4] sm:$0xf] %v543
          %546 = vst [vmem:[#allocation3] sm:$0xff] 0.0
          %547 = vst [vmem:[#allocation3 + $0x8] sm:$0xff] 0.0
        $region68: #{tpu_custom_call.1} parent=51 // pred_fallthru
          _
        %v548 = vld [vmem:[#allocation2] sm:$0xf]
        %v549 = vld [vmem:[#allocation2 + $0x4] sm:$0xf]
        %v550 = vld [vmem:[%s384] sm:$0xff]
        %v551 = vld [vmem:[%s384 + $0x8] sm:$0xff]
        %v552 = vld [vmem:[%s384 + $0x10] sm:$0xff]
        %v553 = vld [vmem:[%s384 + $0x18] sm:$0xff]
        %v554 = vld [vmem:[%s384 + $0x20] sm:$0xff]
        %v555 = vld [vmem:[%s384 + $0x28] sm:$0xff]
        %v556 = vld [vmem:[%s384 + $0x30] sm:$0xff]
        %v557 = vld [vmem:[%s384 + $0x38] sm:$0xff]
        %v558 = vld [vmem:[%s384 + $0x40] sm:$0xff]
        %v559 = vld [vmem:[%s384 + $0x48] sm:$0xff]
        %v560 = vld [vmem:[%s384 + $0x50] sm:$0xff]
        %v561 = vld [vmem:[%s384 + $0x58] sm:$0xff]
        %v562 = vld [vmem:[%s384 + $0x60] sm:$0xff]
        %v563 = vld [vmem:[%s384 + $0x68] sm:$0xff]
        %v564 = vld [vmem:[%s384 + $0x70] sm:$0xff]
        %v565 = vld [vmem:[%s384 + $0x78] sm:$0xff]
        %v566 = vld [vmem:[%s473] sm:$0x3]
        %v568 = vperm.slane %v566, 0
        %v569 = vperm.slane %v566, 1
        %v574 = vunpack.c.l.b16 %v548
        %v575 = vunpack.c.l.b16 %v549
        %v576 = vpack.c.b16 %v575, %v574
        %v594 = vunpack.c.l.b16 %v550
        %v595 = vunpack.c.h.b16 %v550
        %v596 = vunpack.c.l.b16 %v551
        %v597 = vunpack.c.h.b16 %v551
        %v598 = vunpack.c.l.b16 %v552
        %v599 = vunpack.c.h.b16 %v552
        %v600 = vunpack.c.l.b16 %v553
        %v601 = vunpack.c.h.b16 %v553
        %v602 = vunpack.c.l.b16 %v554
        %v603 = vunpack.c.h.b16 %v554
        %v604 = vunpack.c.l.b16 %v555
        %v605 = vunpack.c.h.b16 %v555
        %v606 = vunpack.c.l.b16 %v556
        %v607 = vunpack.c.h.b16 %v556
        %v608 = vunpack.c.l.b16 %v557
        %v609 = vunpack.c.h.b16 %v557
        %v610 = vunpack.c.l.b16 %v558
        %v611 = vunpack.c.h.b16 %v558
        %v612 = vunpack.c.l.b16 %v559
        %v613 = vunpack.c.h.b16 %v559
        %v614 = vunpack.c.l.b16 %v560
        %v615 = vunpack.c.h.b16 %v560
        %v616 = vunpack.c.l.b16 %v561
        %v617 = vunpack.c.h.b16 %v561
        %v618 = vunpack.c.l.b16 %v562
        %v619 = vunpack.c.h.b16 %v562
        %v620 = vunpack.c.l.b16 %v563
        %v621 = vunpack.c.h.b16 %v563
        %v622 = vunpack.c.l.b16 %v564
        %v623 = vunpack.c.h.b16 %v564
        %v624 = vunpack.c.l.b16 %v565
        %v625 = vunpack.c.h.b16 %v565
        %v626 = vpack.c.b16 %v596, %v594
        %v627 = vpack.c.b16 %v597, %v595
        %v628 = vpack.c.b16 %v600, %v598
        %v629 = vpack.c.b16 %v601, %v599
        %v630 = vpack.c.b16 %v604, %v602
        %v631 = vpack.c.b16 %v605, %v603
        %v632 = vpack.c.b16 %v608, %v606
        %v633 = vpack.c.b16 %v609, %v607
        %v634 = vpack.c.b16 %v612, %v610
        %v635 = vpack.c.b16 %v613, %v611
        %v636 = vpack.c.b16 %v616, %v614
        %v637 = vpack.c.b16 %v617, %v615
        %v638 = vpack.c.b16 %v620, %v618
        %v639 = vpack.c.b16 %v621, %v619
        %v640 = vpack.c.b16 %v624, %v622
        %v641 = vpack.c.b16 %v625, %v623
        %658 = vmatpush.bf16.msra.mxu0 %v640
        %659 = vmatpush.bf16.msra.mxu0 %v638
        %660 = vmatpush.bf16.msra.mxu0 %v636
        %661 = vmatpush.bf16.msra.mxu0 %v634
        %662 = vmatpush.bf16.msra.mxu0 %v632
        %663 = vmatpush.bf16.msra.mxu0 %v630
        %664 = vmatpush.bf16.msra.mxu0 %v628
        %665 = vmatpush.bf16.msra.mxu0 %v626
        %666 = vmatmul.bf16.gmra.mxu0 %v576
        %v667 = vpop.f32.mrf.mxu0
        %v668 = vadd.f32 %v568, %v667
        %v669 = vpop.f32.mrf.mxu0
        %v670 = vadd.f32 %v568, %v669
        %671 = vdwg.mxu0
        %672 = vmatpush.bf16.msra.mxu0 %v641
        %673 = vmatpush.bf16.msra.mxu0 %v639
        %674 = vmatpush.bf16.msra.mxu0 %v637
        %675 = vmatpush.bf16.msra.mxu0 %v635
        %676 = vmatpush.bf16.msra.mxu0 %v633
        %677 = vmatpush.bf16.msra.mxu0 %v631
        %678 = vmatpush.bf16.msra.mxu0 %v629
        %679 = vmatpush.bf16.msra.mxu0 %v627
        %680 = vmatmul.bf16.gmra.mxu0 %v576
        %v681 = vpop.f32.mrf.mxu0
        %v682 = vadd.f32 %v569, %v681
        %v683 = vpop.f32.mrf.mxu0
        %v684 = vadd.f32 %v569, %v683
        %685 = vdwg.mxu0
        %v686 = vmax.f32 %v668, 0.0
        %v687 = vmax.f32 %v682, 0.0
        %v688 = vmax.f32 %v670, 0.0
        %v689 = vmax.f32 %v684, 0.0
        %v690 = vld [vmem:[#allocation3] sm:$0xff]
        %v691 = vld [vmem:[#allocation3 + $0x8] sm:$0xff]
        %v692 = vpack.c.bf16 %v688, %v686
        %v693 = vpack.c.bf16 %v689, %v687
        %v694 = vld [vmem:[%s394] sm:$0xf]
        %v695 = vld [vmem:[%s394 + $0x4] sm:$0xf]
        %v696 = vld [vmem:[%s394 + $0x8] sm:$0xf]
        %v697 = vld [vmem:[%s394 + $0xc] sm:$0xf]
        %v698 = vld [vmem:[%s394 + $0x10] sm:$0xf]
        %v699 = vld [vmem:[%s394 + $0x14] sm:$0xf]
        %v700 = vld [vmem:[%s394 + $0x18] sm:$0xf]
        %v701 = vld [vmem:[%s394 + $0x1c] sm:$0xf]
        %v702 = vld [vmem:[%s394 + $0x20] sm:$0xf]
        %v703 = vld [vmem:[%s394 + $0x24] sm:$0xf]
        %v704 = vld [vmem:[%s394 + $0x28] sm:$0xf]
        %v705 = vld [vmem:[%s394 + $0x2c] sm:$0xf]
        %v706 = vld [vmem:[%s394 + $0x30] sm:$0xf]
        %v707 = vld [vmem:[%s394 + $0x34] sm:$0xf]
        %v708 = vld [vmem:[%s394 + $0x38] sm:$0xf]
        %v709 = vld [vmem:[%s394 + $0x3c] sm:$0xf]
        %v710 = vld [vmem:[%s394 + $0x40] sm:$0xf]
        %v711 = vld [vmem:[%s394 + $0x44] sm:$0xf]
        %v712 = vld [vmem:[%s394 + $0x48] sm:$0xf]
        %v713 = vld [vmem:[%s394 + $0x4c] sm:$0xf]
        %v714 = vld [vmem:[%s394 + $0x50] sm:$0xf]
        %v715 = vld [vmem:[%s394 + $0x54] sm:$0xf]
        %v716 = vld [vmem:[%s394 + $0x58] sm:$0xf]
        %v717 = vld [vmem:[%s394 + $0x5c] sm:$0xf]
        %v718 = vld [vmem:[%s394 + $0x60] sm:$0xf]
        %v719 = vld [vmem:[%s394 + $0x64] sm:$0xf]
        %v720 = vld [vmem:[%s394 + $0x68] sm:$0xf]
        %v721 = vld [vmem:[%s394 + $0x6c] sm:$0xf]
        %v722 = vld [vmem:[%s394 + $0x70] sm:$0xf]
        %v723 = vld [vmem:[%s394 + $0x74] sm:$0xf]
        %v724 = vld [vmem:[%s394 + $0x78] sm:$0xf]
        %v725 = vld [vmem:[%s394 + $0x7c] sm:$0xf]
        %v758 = vunpack.c.l.b16 %v694
        %v759 = vunpack.c.l.b16 %v695
        %v760 = vunpack.c.l.b16 %v696
        %v761 = vunpack.c.l.b16 %v697
        %v762 = vunpack.c.l.b16 %v698
        %v763 = vunpack.c.l.b16 %v699
        %v764 = vunpack.c.l.b16 %v700
        %v765 = vunpack.c.l.b16 %v701
        %v766 = vunpack.c.l.b16 %v702
        %v767 = vunpack.c.l.b16 %v703
        %v768 = vunpack.c.l.b16 %v704
        %v769 = vunpack.c.l.b16 %v705
        %v770 = vunpack.c.l.b16 %v706
        %v771 = vunpack.c.l.b16 %v707
        %v772 = vunpack.c.l.b16 %v708
        %v773 = vunpack.c.l.b16 %v709
        %v774 = vunpack.c.l.b16 %v710
        %v775 = vunpack.c.l.b16 %v711
        %v776 = vunpack.c.l.b16 %v712
        %v777 = vunpack.c.l.b16 %v713
        %v778 = vunpack.c.l.b16 %v714
        %v779 = vunpack.c.l.b16 %v715
        %v780 = vunpack.c.l.b16 %v716
        %v781 = vunpack.c.l.b16 %v717
        %v782 = vunpack.c.l.b16 %v718
        %v783 = vunpack.c.l.b16 %v719
        %v784 = vunpack.c.l.b16 %v720
        %v785 = vunpack.c.l.b16 %v721
        %v786 = vunpack.c.l.b16 %v722
        %v787 = vunpack.c.l.b16 %v723
        %v788 = vunpack.c.l.b16 %v724
        %v789 = vunpack.c.l.b16 %v725
        %v790 = vpack.c.b16 %v759, %v758
        %v791 = vpack.c.b16 %v761, %v760
        %v792 = vpack.c.b16 %v763, %v762
        %v793 = vpack.c.b16 %v765, %v764
        %v794 = vpack.c.b16 %v767, %v766
        %v795 = vpack.c.b16 %v769, %v768
        %v796 = vpack.c.b16 %v771, %v770
        %v797 = vpack.c.b16 %v773, %v772
        %v798 = vpack.c.b16 %v775, %v774
        %v799 = vpack.c.b16 %v777, %v776
        %v800 = vpack.c.b16 %v779, %v778
        %v801 = vpack.c.b16 %v781, %v780
        %v802 = vpack.c.b16 %v783, %v782
        %v803 = vpack.c.b16 %v785, %v784
        %v804 = vpack.c.b16 %v787, %v786
        %v805 = vpack.c.b16 %v789, %v788
        %822 = vmatpush.bf16.msra.mxu0 %v797
        %823 = vmatpush.bf16.msra.mxu0 %v796
        %824 = vmatpush.bf16.msra.mxu0 %v795
        %825 = vmatpush.bf16.msra.mxu0 %v794
        %826 = vmatpush.bf16.msra.mxu0 %v793
        %827 = vmatpush.bf16.msra.mxu0 %v792
        %828 = vmatpush.bf16.msra.mxu0 %v791
        %829 = vmatpush.bf16.msra.mxu0 %v790
        %830 = vmatmul.bf16.gmra.mxu0 %v692
        %v831 = vpop.f32.mrf.mxu0
        %v832 = vadd.f32 0.0, %v831
        %v833 = vpop.f32.mrf.mxu0
        %v834 = vadd.f32 0.0, %v833
        %835 = vdwg.mxu0
        %836 = vmatpush.bf16.msra.mxu0 %v805
        %837 = vmatpush.bf16.msra.mxu0 %v804
        %838 = vmatpush.bf16.msra.mxu0 %v803
        %839 = vmatpush.bf16.msra.mxu0 %v802
        %840 = vmatpush.bf16.msra.mxu0 %v801
        %841 = vmatpush.bf16.msra.mxu0 %v800
        %842 = vmatpush.bf16.msra.mxu0 %v799
        %843 = vmatpush.bf16.msra.mxu0 %v798
        %844 = vmatmul.bf16.gmra.mxu0 %v693
        %v845 = vpop.f32.mrf.mxu0
        %v846 = vadd.f32 %v832, %v845
        %v847 = vpop.f32.mrf.mxu0
        %v848 = vadd.f32 %v834, %v847
        %849 = vdwg.mxu0
        %v850 = vadd.f32 %v690, %v846
        %v851 = vadd.f32 %v691, %v848
        %852 = vst [vmem:[#allocation3] sm:$0xff] %v850
        %853 = vst [vmem:[#allocation3 + $0x8] sm:$0xff] %v851
        // Predicated region
        $region69: #{tpu_custom_call.1} parent=51 // pred_check
          %p854 = pneg %p481
        $region70: #{tpu_custom_call.1} parent=51 // pred_check_branch
          %856 = sbr.rel (%p854) target = $region72
        $region71: #{tpu_custom_call.1} parent=51 // pred_region
          %v857 = vld [vmem:[#allocation3] sm:$0xff]
          %v858 = vld [vmem:[#allocation3 + $0x8] sm:$0xff]
          %v859 = vld [vmem:[%s478] sm:$0x1]
          %v861 = vperm.slane %v859, 0
          %v863 = vadd.f32 %v857, %v861
          %v864 = vadd.f32 %v858, %v861
          %v865 = vld [vmem:[%s464] sm:$0xff]
          %v866 = vld [vmem:[%s464 + $0x8] sm:$0xff]
          %868 = vset.pattern.permute.xlu0 0
          %869 = vperm.xlu0 %868, %v865
          %v870 = vpop.permute.xlu0 %869
          %873 = vset.pattern.permute.xlu0 0
          %874 = vperm.xlu0 %873, %v866
          %v875 = vpop.permute.xlu0 %874
          %v877 = vmul.f32 %v863, %v870
          %v878 = vmul.f32 %v864, %v875
          %v879 = vlaneseq
          %v880 = vshrl.u32 %v879, 7
          %v881 = vadd.s32 %v880, 8
          %v882 = vadd.s32 %v880, 16
          %v883 = vadd.s32 %v880, 24
          %v884 = vld [vmem:[%s459] sm:$0x1]
          %v885 = vperm.slane %v884, 0
          %vm886 = vcmp.eq.s32.totalorder %v880, %v885
          %vm887 = vcmp.eq.s32.totalorder %v881, %v885
          %vm888 = vcmp.eq.s32.totalorder %v882, %v885
          %vm889 = vcmp.eq.s32.totalorder %v883, %v885
          %v890 = vsel %vm886, 1.0, 0.0
          %v891 = vsel %vm887, 1.0, 0.0
          %v892 = vsel %vm888, 1.0, 0.0
          %v893 = vsel %vm889, 1.0, 0.0
          %v894 = vld [vmem:[#allocation9] sm:$0xff]
          %v895 = vld [vmem:[#allocation9 + $0x8] sm:$0xff]
          %v896 = vld [vmem:[#allocation9 + $0x10] sm:$0xff]
          %v897 = vld [vmem:[#allocation9 + $0x18] sm:$0xff]
          %vm898 = vcmask 130048
          %v900 = vsel %vm898, %v890, 0
          %v903 = vsel %vm898, %v891, 0
          %v906 = vsel %vm898, %v892, 0
          %v909 = vsel %vm898, %v893, 0
          %911 = vmatpush.msra.mxu0 0.0
          %912 = vmatpush.msra.mxu0 0.0
          %913 = vmatpush.msra.mxu0 0.0
          %914 = vmatpush.msra.mxu0 0.0
          %915 = vmatpush.msra.mxu0 0.0
          %916 = vmatpush.msra.mxu0 0.0
          %917 = vmatpush.msra.mxu0 0.0
          %918 = vmatpush.msra.mxu0 0.0
          %919 = vmatpush.msra.mxu0 0.0
          %920 = vmatpush.msra.mxu0 0.0
          %921 = vmatpush.msra.mxu0 0.0
          %922 = vmatpush.msra.mxu0 0.0
          %923 = vmatpush.msra.mxu0 0.0
          %924 = vmatpush.msra.mxu0 0.0
          %925 = vmatpush.msra.mxu0 %v878
          %926 = vmatpush.msra.mxu0 %v877
          %927 = vmatmul.f32.gmra.mxu0 %v900
          %v928 = vpop.f32.mrf.mxu0
          %v929 = vadd.f32 0.0, %v928
          %930 = vmatmul.f32.gmra.mxu0 %v903
          %v931 = vpop.f32.mrf.mxu0
          %v932 = vadd.f32 0.0, %v931
          %933 = vmatmul.f32.gmra.mxu0 %v906
          %v934 = vpop.f32.mrf.mxu0
          %v935 = vadd.f32 0.0, %v934
          %936 = vmatmul.f32.gmra.mxu0 %v909
          %v937 = vpop.f32.mrf.mxu0
          %v938 = vadd.f32 0.0, %v937
          %939 = vdwg.mxu0
          %v940 = vadd.f32 %v894, %v929
          %v941 = vadd.f32 %v895, %v932
          %v942 = vadd.f32 %v896, %v935
          %v943 = vadd.f32 %v897, %v938
          %944 = vst [vmem:[#allocation9] sm:$0xff] %v940
          %945 = vst [vmem:[#allocation9 + $0x8] sm:$0xff] %v941
          %946 = vst [vmem:[#allocation9 + $0x10] sm:$0xff] %v942
          %947 = vst [vmem:[#allocation9 + $0x18] sm:$0xff] %v943
        $region72: #{tpu_custom_call.1} parent=51 // pred_fallthru
          _
        // Predicated region
        $region73: #{tpu_custom_call.1} parent=51 // pred_check
          %p948 = pneg %p260
        $region74: #{tpu_custom_call.1} parent=51 // pred_check_branch
          %950 = sbr.rel (%p948) target = $region76
        $region75: #{tpu_custom_call.1} parent=51 // pred_region
          %952 = vsyncadd [#allocation6], 0
          %s953 = sshll.u32 [#allocation9], 4
          %s954 = int_to_ptr.vmem [resolvable:$true] %s953
          %s955 = sshll.u32 %s8, 4
          %s956 = int_to_ptr.hbm [resolvable:$true] %s955
          %961 = dma.vmem_to_hbm [thread:$0]  %s954, 512, %s956, [#allocation6], 128, 128, 8
        $region76: #{tpu_custom_call.1} parent=51 // pred_fallthru
          _
        // Predicated region
        $region77: #{tpu_custom_call.1} parent=51 // pred_check
          %p962 = pneg %p260
        $region78: #{tpu_custom_call.1} parent=51 // pred_check_branch
          %964 = sbr.rel (%p962) target = $region80
        $region79: #{tpu_custom_call.1} parent=51 // pred_region
          %966 = dma.done [#allocation6], 512
        $region80: #{tpu_custom_call.1} parent=51 // pred_fallthru
          _
      $region52: #{tpu_custom_call.1} parent=5 // pred_fallthru
        _
      %p967 = scmp.le.s32.totalorder 2, %s21
      // Predicated region
      $region81: #{tpu_custom_call.1} parent=5 // pred_check
        %p968 = pneg %p967
      $region82: #{tpu_custom_call.1} parent=5 // pred_check_branch
        %970 = sbr.rel (%p968) target = $region84
      $region83: #{tpu_custom_call.1} parent=5 // pred_region
        %s971 = ssub.s32 %s21, 2
      $region84: #{tpu_custom_call.1} parent=5 // pred_fallthru
        _
    $region6: #{tpu_custom_call.1} parent=1 // loop_footer
      %s25 = sadd.s32 1, %s21
    $region7: #{tpu_custom_call.1} parent=1 // loop_footer_branch
      %20 = sbr.rel target = $region3
    $region8: #{tpu_custom_call.1} parent=1 // loop_exit
      _
    %972 = vsyncpa [#allocation5], 1
    %s973 = scalar_lea.sflag [#allocation5], 1
    %974 = vsyncpa %s973, 1
    %975 = vsyncpa [#allocation8], 1
    %s976 = scalar_lea.sflag [#allocation8], 1
    %977 = vsyncpa %s976, 1
    %978 = vsyncpa [#allocation6], 1
    %s979 = scalar_lea.sflag [#allocation6], 1
    %980 = vsyncpa %s979, 1

// kernel: tpu_custom_call.1
$region0: #{tpu_custom_call.1}
  #allocation0 [shape = 'u32[]', space=smem, size = 0x4, offset = 0x4, fixed_abs, tag = 'smem constant byte address 0x4 - core index']
  #allocation1 [shape = 'u32[72,128]{1,0:T(1,128)}', space=vmem, size = 0x9000, scoped, tag = 'internal scratch']
  #allocation2 [shape = 'bf16[16,128]{1,0:T(8,128)(2,1)}', space=vmem, size = 0x1000, scoped, tag = 'scratch operand']
  #allocation3 [shape = 'f32[16,128]{1,0:T(8,128)}', space=vmem, size = 0x2000, scoped, tag = 'scratch operand']
  %s0 = inlined_call_operand.vmem [shape: s32[4,16,1], index: 0, kind: input, shape index: {}]
  %s1 = inlined_call_operand.vmem [shape: s32[4,1,16], index: 1, kind: input, shape index: {}]
  %s2 = inlined_call_operand.vmem [shape: f32[4,16,1], index: 2, kind: input, shape index: {}]
  %s3 = inlined_call_operand.vmem [shape: bf16[32,128], index: 3, kind: input, shape index: {}]
  %s4 = inlined_call_operand.hbm [shape: bf16[4,128,256], index: 4, kind: input, shape index: {}]
  %s5 = inlined_call_operand.vmem [shape: f32[4,1,256], index: 5, kind: input, shape index: {}]
  %s6 = inlined_call_operand.hbm [shape: bf16[4,256,128], index: 6, kind: input, shape index: {}]
  %s7 = inlined_call_operand.vmem [shape: f32[4,1,128], index: 7, kind: input, shape index: {}]
  %s8 = inlined_call_operand.hbm [shape: f32[32,128], index: 8, kind: output, shape index: {}]
  %s9 = sld [smem:[#allocation0]]
  $region85: #{tpu_custom_call.1} parent=0
    _
  %s11 = ssub.s32 1, %s9
  %s12 = scalar_select 0, %s11, %s9
  $region1: #{tpu_custom_call.1} parent=0
    #allocation4 [shape = 'u8[131072]{0}', space=vmem, size = 0x20000, scoped, tag = 'input window, operand 4']
    #allocation5 [shape = 's32[2]{0}', space=sflag, size = 0x8, scoped, tag = 'scoped memory for tpu_custom_call.1']
    #allocation6 [shape = 's32[2]{0}', space=sflag, size = 0x8, scoped, tag = 'scoped memory for tpu_custom_call.1']
    #allocation7 [shape = 'u8[131072]{0}', space=vmem, size = 0x20000, scoped, tag = 'input window, operand 6']
    #allocation8 [shape = 's32[2]{0}', space=sflag, size = 0x8, scoped, tag = 'scoped memory for tpu_custom_call.1']
    #allocation9 [shape = 'u8[16384]{0}', space=vmem, size = 0x4000, scoped, tag = 'output window, operand 0, single buffered']
    %13 = vsyncpa [#allocation5], 0
    %s14 = scalar_lea.sflag [#allocation5], 1
    %15 = vsyncpa %s14, 0
    %16 = vsyncpa [#allocation8], 0
    %s17 = scalar_lea.sflag [#allocation8], 1
    %18 = vsyncpa %s17, 0
    %19 = vsyncpa [#allocation6], 0
    loop: start=0, step=1, limit=6
    $region2: #{tpu_custom_call.1} parent=1 // loop_pre_header
      _
    $region3: #{tpu_custom_call.1} parent=1 // loop_header
      %s21 = sphi 0, %s25
      %p22 = scmp.ge.s32.totalorder %s21, 6
      %s28 = sphi 0, %s40
      %s29 = sphi 0, %s36
      %s30 = sphi 0, %s28
      %s31 = sphi 0, %s29
      %s32 = sphi 0, %s30
      %s33 = sphi 0, %s31
      %s43 = sphi 0, %s45
      %s46 = sphi 0, %s43
      %s47 = sphi 0, %s46
      %s63 = sphi 0, %s47
      %s69 = sphi 0, %s71
      %s72 = sphi 0, %s69
      %s73 = sphi 0, %s72
      %s89 = sphi 0, %s73
      %s95 = sphi 0, %s97
      %s98 = sphi 0, %s95
      %s99 = sphi 0, %s98
      %s115 = sphi 0, %s99
      %s119 = sphi 0, %s119
      %s121 = sphi 0, %s119
      %s122 = sphi 0, %s121
      %s136 = sphi 0, %s122
      %s144 = sphi 0, %s146
      %s147 = sphi 0, %s144
      %s148 = sphi 0, %s147
      %s164 = sphi 0, %s148
      %s172 = sphi 0, %s174
      %s175 = sphi 0, %s172
      %s176 = sphi 0, %s175
      %s192 = sphi 0, %s176
      %s200 = sphi 0, %s202
      %s203 = sphi 0, %s200
      %s204 = sphi 0, %s203
      %s220 = sphi 0, %s204
      %s226 = sphi 0, %s228
      %s229 = sphi 0, %s226
      %s230 = sphi 0, %s229
      %s246 = sphi 0, %s230
      %s250 = sphi 0, %s250
      %s252 = sphi 0, %s250
      %s253 = sphi 0, %s252
      %s267 = sphi 0, %s253
    $region4: #{tpu_custom_call.1} parent=1 // loop_header_branch
      %24 = sbr.rel (%p22) target = $region8
    $region5: #{tpu_custom_call.1} parent=1 // loop_body
      %s26 = ssub.s32 %s21, 1
      %s27 = ssub.s32 %s21, 2
      %s34 = sadd.s32 1, %s29
      %p35 = scmp.ge.s32.totalorder %s34, 1
      %s36 = scalar_select %p35, 0, %s34
      %s37 = sadd.s32 1, %s28
      %s38 = scalar_select %p35, %s37, %s28
      %p39 = scmp.ge.s32.totalorder %s38, 4
      %s40 = scalar_select %p39, 0, %s38
      %s41 = ssub.s32 %s28, %s40
      %p42 = scmp.eq.s32.totalorder %s41, 0
      %s44 = sadd.s32 %s43, 1
      %s45 = scalar_select %p42, %s43, %s44
      %p48 = pneg %p42
      %p49 = scmp.eq.s32.totalorder %s21, 3
      %p50 = por %p48, %p49
      %p51 = scmp.ne.s32.totalorder %s43, %s46
      %p52 = scmp.eq.s32.totalorder %s21, 0
      %p53 = por %p51, %p52
      %p54 = scmp.ne.s32.totalorder %s43, %s46
      %p55 = scmp.eq.s32.totalorder %s26, 3
      %p56 = por %p54, %p55
      %p57 = scmp.ne.s32.totalorder %s46, %s47
      %p58 = scmp.eq.s32.totalorder %s26, 0
      %p59 = por %p57, %p58
      %p60 = scmp.ne.s32.totalorder %s46, %s47
      %p61 = scmp.eq.s32.totalorder %s27, 3
      %p62 = por %p60, %p61
      %p64 = scmp.ne.s32.totalorder %s47, %s63
      %p65 = scmp.eq.s32.totalorder %s27, 0
      %p66 = por %p64, %p65
      %s67 = ssub.s32 %s28, %s40
      %p68 = scmp.eq.s32.totalorder %s67, 0
      %s70 = sadd.s32 %s69, 1
      %s71 = scalar_select %p68, %s69, %s70
      %p74 = pneg %p68
      %p75 = scmp.eq.s32.totalorder %s21, 3
      %p76 = por %p74, %p75
      %p77 = scmp.ne.s32.totalorder %s69, %s72
      %p78 = scmp.eq.s32.totalorder %s21, 0
      %p79 = por %p77, %p78
      %p80 = scmp.ne.s32.totalorder %s69, %s72
      %p81 = scmp.eq.s32.totalorder %s26, 3
      %p82 = por %p80, %p81
      %p83 = scmp.ne.s32.totalorder %s72, %s73
      %p84 = scmp.eq.s32.totalorder %s26, 0
      %p85 = por %p83, %p84
      %p86 = scmp.ne.s32.totalorder %s72, %s73
      %p87 = scmp.eq.s32.totalorder %s27, 3
      %p88 = por %p86, %p87
      %p90 = scmp.ne.s32.totalorder %s73, %s89
      %p91 = scmp.eq.s32.totalorder %s27, 0
      %p92 = por %p90, %p91
      %s93 = ssub.s32 %s28, %s40
      %p94 = scmp.eq.s32.totalorder %s93, 0
      %s96 = sadd.s32 %s95, 1
      %s97 = scalar_select %p94, %s95, %s96
      %p100 = pneg %p94
      %p101 = scmp.eq.s32.totalorder %s21, 3
      %p102 = por %p100, %p101
      %p103 = scmp.ne.s32.totalorder %s95, %s98
      %p104 = scmp.eq.s32.totalorder %s21, 0
      %p105 = por %p103, %p104
      %p106 = scmp.ne.s32.totalorder %s95, %s98
      %p107 = scmp.eq.s32.totalorder %s26, 3
      %p108 = por %p106, %p107
      %p109 = scmp.ne.s32.totalorder %s98, %s99
      %p110 = scmp.eq.s32.totalorder %s26, 0
      %p111 = por %p109, %p110
      %p112 = scmp.ne.s32.totalorder %s98, %s99
      %p113 = scmp.eq.s32.totalorder %s27, 3
      %p114 = por %p112, %p113
      %p116 = scmp.ne.s32.totalorder %s99, %s115
      %p117 = scmp.eq.s32.totalorder %s27, 0
      %p118 = por %p116, %p117
      %s120 = sadd.s32 %s119, 1
      %p123 = scmp.eq.s32.totalorder %s21, 3
      %p124 = scmp.ne.s32.totalorder %s119, %s121
      %p125 = scmp.eq.s32.totalorder %s21, 0
      %p126 = por %p124, %p125
      %p127 = scmp.ne.s32.totalorder %s119, %s121
      %p128 = scmp.eq.s32.totalorder %s26, 3
      %p129 = por %p127, %p128
      %p130 = scmp.ne.s32.totalorder %s121, %s122
      %p131 = scmp.eq.s32.totalorder %s26, 0
      %p132 = por %p130, %p131
      %p133 = scmp.ne.s32.totalorder %s121, %s122
      %p134 = scmp.eq.s32.totalorder %s27, 3
      %p135 = por %p133, %p134
      %p137 = scmp.ne.s32.totalorder %s122, %s136
      %p138 = scmp.eq.s32.totalorder %s27, 0
      %p139 = por %p137, %p138
      %s140 = ssub.s32 %s28, %s40
      %s141 = ssub.s32 %s29, %s36
      %s142 = sor.u32 %s140, %s141
      %p143 = scmp.eq.s32.totalorder %s142, 0
      %s145 = sadd.s32 %s144, 1
      %s146 = scalar_select %p143, %s144, %s145
      %p149 = pneg %p143
      %p150 = scmp.eq.s32.totalorder %s21, 3
      %p151 = por %p149, %p150
      %p152 = scmp.ne.s32.totalorder %s144, %s147
      %p153 = scmp.eq.s32.totalorder %s21, 0
      %p154 = por %p152, %p153
      %p155 = scmp.ne.s32.totalorder %s144, %s147
      %p156 = scmp.eq.s32.totalorder %s26, 3
      %p157 = por %p155, %p156
      %p158 = scmp.ne.s32.totalorder %s147, %s148
      %p159 = scmp.eq.s32.totalorder %s26, 0
      %p160 = por %p158, %p159
      %p161 = scmp.ne.s32.totalorder %s147, %s148
      %p162 = scmp.eq.s32.totalorder %s27, 3
      %p163 = por %p161, %p162
      %p165 = scmp.ne.s32.totalorder %s148, %s164
      %p166 = scmp.eq.s32.totalorder %s27, 0
      %p167 = por %p165, %p166
      %s168 = ssub.s32 %s28, %s40
      %s169 = ssub.s32 %s29, %s36
      %s170 = sor.u32 %s168, %s169
      %p171 = scmp.eq.s32.totalorder %s170, 0
      %s173 = sadd.s32 %s172, 1
      %s174 = scalar_select %p171, %s172, %s173
      %p177 = pneg %p171
      %p178 = scmp.eq.s32.totalorder %s21, 3
      %p179 = por %p177, %p178
      %p180 = scmp.ne.s32.totalorder %s172, %s175
      %p181 = scmp.eq.s32.totalorder %s21, 0
      %p182 = por %p180, %p181
      %p183 = scmp.ne.s32.totalorder %s172, %s175
      %p184 = scmp.eq.s32.totalorder %s26, 3
      %p185 = por %p183, %p184
      %p186 = scmp.ne.s32.totalorder %s175, %s176
      %p187 = scmp.eq.s32.totalorder %s26, 0
      %p188 = por %p186, %p187
      %p189 = scmp.ne.s32.totalorder %s175, %s176
      %p190 = scmp.eq.s32.totalorder %s27, 3
      %p191 = por %p189, %p190
      %p193 = scmp.ne.s32.totalorder %s176, %s192
      %p194 = scmp.eq.s32.totalorder %s27, 0
      %p195 = por %p193, %p194
      %s196 = ssub.s32 %s28, %s40
      %s197 = ssub.s32 %s29, %s36
      %s198 = sor.u32 %s196, %s197
      %p199 = scmp.eq.s32.totalorder %s198, 0
      %s201 = sadd.s32 %s200, 1
      %s202 = scalar_select %p199, %s200, %s201
      %p205 = pneg %p199
      %p206 = scmp.eq.s32.totalorder %s21, 3
      %p207 = por %p205, %p206
      %p208 = scmp.ne.s32.totalorder %s200, %s203
      %p209 = scmp.eq.s32.totalorder %s21, 0
      %p210 = por %p208, %p209
      %p211 = scmp.ne.s32.totalorder %s200, %s203
      %p212 = scmp.eq.s32.totalorder %s26, 3
      %p213 = por %p211, %p212
      %p214 = scmp.ne.s32.totalorder %s203, %s204
      %p215 = scmp.eq.s32.totalorder %s26, 0
      %p216 = por %p214, %p215
      %p217 = scmp.ne.s32.totalorder %s203, %s204
      %p218 = scmp.eq.s32.totalorder %s27, 3
      %p219 = por %p217, %p218
      %p221 = scmp.ne.s32.totalorder %s204, %s220
      %p222 = scmp.eq.s32.totalorder %s27, 0
      %p223 = por %p221, %p222
      %s224 = ssub.s32 %s28, %s40
      %p225 = scmp.eq.s32.totalorder %s224, 0
      %s227 = sadd.s32 %s226, 1
      %s228 = scalar_select %p225, %s226, %s227
      %p231 = pneg %p225
      %p232 = scmp.eq.s32.totalorder %s21, 3
      %p233 = por %p231, %p232
      %p234 = scmp.ne.s32.totalorder %s226, %s229
      %p235 = scmp.eq.s32.totalorder %s21, 0
      %p236 = por %p234, %p235
      %p237 = scmp.ne.s32.totalorder %s226, %s229
      %p238 = scmp.eq.s32.totalorder %s26, 3
      %p239 = por %p237, %p238
      %p240 = scmp.ne.s32.totalorder %s229, %s230
      %p241 = scmp.eq.s32.totalorder %s26, 0
      %p242 = por %p240, %p241
      %p243 = scmp.ne.s32.totalorder %s229, %s230
      %p244 = scmp.eq.s32.totalorder %s27, 3
      %p245 = por %p243, %p244
      %p247 = scmp.ne.s32.totalorder %s230, %s246
      %p248 = scmp.eq.s32.totalorder %s27, 0
      %p249 = por %p247, %p248
      %s251 = sadd.s32 %s250, 1
      %p254 = scmp.eq.s32.totalorder %s21, 3
      %p255 = scmp.ne.s32.totalorder %s250, %s252
      %p256 = scmp.eq.s32.totalorder %s21, 0
      %p257 = por %p255, %p256
      %p258 = scmp.ne.s32.totalorder %s250, %s252
      %p259 = scmp.eq.s32.totalorder %s26, 3
      %p260 = por %p258, %p259
      %p261 = scmp.ne.s32.totalorder %s252, %s253
      %p262 = scmp.eq.s32.totalorder %s26, 0
      %p263 = por %p261, %p262
      %p264 = scmp.ne.s32.totalorder %s252, %s253
      %p265 = scmp.eq.s32.totalorder %s27, 3
      %p266 = por %p264, %p265
      %p268 = scmp.ne.s32.totalorder %s253, %s267
      %p269 = scmp.eq.s32.totalorder %s27, 0
      %p270 = por %p268, %p269
      %p271 = scmp.le.s32.totalorder 1, %s21
      %p272 = scmp.lt.s32.totalorder %s21, 5
      %p273 = pnand %p271, %p272
      %p274 = pneg %p273
      // Predicated region
      $region9: #{tpu_custom_call.1} parent=5 // pred_check
        _
      $region10: #{tpu_custom_call.1} parent=5 // pred_check_branch
        %276 = sbr.rel (%p273) target = $region12
      $region11: #{tpu_custom_call.1} parent=5 // pred_region
        %s277 = ssub.s32 %s21, 1
        // Predicated region
        $region13: #{tpu_custom_call.1} parent=11 // pred_check
          %p278 = pneg %p132
        $region14: #{tpu_custom_call.1} parent=11 // pred_check_branch
          %280 = sbr.rel (%p278) target = $region16
        $region15: #{tpu_custom_call.1} parent=11 // pred_region
          _
        $region16: #{tpu_custom_call.1} parent=11 // pred_fallthru
          _
      $region12: #{tpu_custom_call.1} parent=5 // pred_fallthru
        _
      %p281 = scmp.lt.s32.totalorder %s21, 4
      // Predicated region
      $region17: #{tpu_custom_call.1} parent=5 // pred_check
        %p282 = pneg %p281
      $region18: #{tpu_custom_call.1} parent=5 // pred_check_branch
        %284 = sbr.rel (%p282) target = $region20
      $region19: #{tpu_custom_call.1} parent=5 // pred_region
        // Predicated region
        $region21: #{tpu_custom_call.1} parent=19 // pred_check
          %p285 = pneg %p53
        $region22: #{tpu_custom_call.1} parent=19 // pred_check_branch
          %287 = sbr.rel (%p285) target = $region24
        $region23: #{tpu_custom_call.1} parent=19 // pred_region
          %p288 = scmp.lt.s32.totalorder %s28, 3
          %s289 = scalar_select %p288, %s28, 3
          %s290 = smul.addr %s289, 2
          %s291 = smul.addr %s290, 8
          %s292 = scalar_lea.vmem %s0, %s291
        $region24: #{tpu_custom_call.1} parent=19 // pred_fallthru
          _
        // Predicated region
        $region25: #{tpu_custom_call.1} parent=19 // pred_check
          %p293 = pneg %p79
        $region26: #{tpu_custom_call.1} parent=19 // pred_check_branch
          %295 = sbr.rel (%p293) target = $region28
        $region27: #{tpu_custom_call.1} parent=19 // pred_region
          %p296 = scmp.lt.s32.totalorder %s28, 3
          %s297 = scalar_select %p296, %s28, 3
          %s298 = scalar_lea.vmem %s1, %s297
        $region28: #{tpu_custom_call.1} parent=19 // pred_fallthru
          _
        // Predicated region
        $region29: #{tpu_custom_call.1} parent=19 // pred_check
          %p299 = pneg %p105
        $region30: #{tpu_custom_call.1} parent=19 // pred_check_branch
          %301 = sbr.rel (%p299) target = $region32
        $region31: #{tpu_custom_call.1} parent=19 // pred_region
          %p302 = scmp.lt.s32.totalorder %s28, 3
          %s303 = scalar_select %p302, %s28, 3
          %s304 = smul.addr %s303, 2
          %s305 = smul.addr %s304, 8
          %s306 = scalar_lea.vmem %s2, %s305
        $region32: #{tpu_custom_call.1} parent=19 // pred_fallthru
          _
        // Predicated region
        $region33: #{tpu_custom_call.1} parent=19 // pred_check
          %p307 = pneg %p154
        $region34: #{tpu_custom_call.1} parent=19 // pred_check_branch
          %309 = sbr.rel (%p307) target = $region36
        $region35: #{tpu_custom_call.1} parent=19 // pred_region
          %s310 = sand.u32 %s144, 1
          %s311 = scalar_lea.sflag [#allocation5], %s310
          %s312 = sand.u32 %s144, 1
          %s313 = smul.addr %s312, 128
          %s314 = scalar_lea.vmem [#allocation4], %s313
          %s315 = smul.u32 2, %s29
          %317 = vsyncadd %s311, 0
          %s318 = smul.addr %s28, 32
          %s319 = sadd.s32 %s315, %s318
          %s320 = smul.addr %s319, 4
          %s321 = scalar_lea.hbm %s4, %s320
          %s322 = sshll.u32 %s321, 4
          %s323 = int_to_ptr.hbm [resolvable:$true] %s322
          %s324 = sshll.u32 %s314, 4
          %s325 = int_to_ptr.vmem [resolvable:$true] %s324
          %330 = dma.hbm_to_vmem [thread:$0]  %s323, 2048, %s325, %s311, 128, 128, 8
        $region36: #{tpu_custom_call.1} parent=19 // pred_fallthru
          _
        // Predicated region
        $region37: #{tpu_custom_call.1} parent=19 // pred_check
          %p331 = pneg %p182
        $region38: #{tpu_custom_call.1} parent=19 // pred_check_branch
          %333 = sbr.rel (%p331) target = $region40
        $region39: #{tpu_custom_call.1} parent=19 // pred_region
          %s334 = smul.u32 2, %s29
          %p335 = scmp.lt.s32.totalorder %s28, 3
          %s336 = scalar_select %p335, %s28, 3
          %p337 = scmp.lt.s32.totalorder %s334, 1
          %s338 = scalar_select %p337, %s334, 1
          %s339 = smul.addr %s336, 2
          %s340 = sadd.s32 %s338, %s339
          %s341 = scalar_lea.vmem %s5, %s340
          %s342 = smul.u32 2, %s29
        $region40: #{tpu_custom_call.1} parent=19 // pred_fallthru
          _
        // Predicated region
        $region41: #{tpu_custom_call.1} parent=19 // pred_check
          %p343 = pneg %p210
        $region42: #{tpu_custom_call.1} parent=19 // pred_check_branch
          %345 = sbr.rel (%p343) target = $region44
        $region43: #{tpu_custom_call.1} parent=19 // pred_region
          %s346 = sand.u32 %s200, 1
          %s347 = scalar_lea.sflag [#allocation8], %s346
          %s348 = sand.u32 %s200, 1
          %s349 = smul.addr %s348, 128
          %s350 = scalar_lea.vmem [#allocation7], %s349
          %s351 = smul.u32 32, %s29
          %353 = vsyncadd %s347, 0
          %s354 = smul.addr %s28, 32
          %s355 = sadd.s32 %s351, %s354
          %s356 = smul.addr %s355, 4
          %s357 = scalar_lea.hbm %s6, %s356
          %s358 = sshll.u32 %s357, 4
          %s359 = int_to_ptr.hbm [resolvable:$true] %s358
          %s360 = sshll.u32 %s350, 4
          %s361 = int_to_ptr.vmem [resolvable:$true] %s360
          %366 = dma.hbm_to_vmem [thread:$0]  %s359, 2048, %s361, %s347, 64, 64, 4
        $region44: #{tpu_custom_call.1} parent=19 // pred_fallthru
          _
        // Predicated region
        $region45: #{tpu_custom_call.1} parent=19 // pred_check
          %p367 = pneg %p236
        $region46: #{tpu_custom_call.1} parent=19 // pred_check_branch
          %369 = sbr.rel (%p367) target = $region48
        $region47: #{tpu_custom_call.1} parent=19 // pred_region
          %p370 = scmp.lt.s32.totalorder %s28, 3
          %s371 = scalar_select %p370, %s28, 3
          %s372 = scalar_lea.vmem %s7, %s371
        $region48: #{tpu_custom_call.1} parent=19 // pred_fallthru
          _
      $region20: #{tpu_custom_call.1} parent=5 // pred_fallthru
        _
      %p373 = scmp.le.s32.totalorder 1, %s21
      %p374 = scmp.lt.s32.totalorder %s21, 5
      %p375 = pnand %p373, %p374
      %p376 = pneg %p375
      // Predicated region
      $region49: #{tpu_custom_call.1} parent=5 // pred_check
        _
      $region50: #{tpu_custom_call.1} parent=5 // pred_check_branch
        %378 = sbr.rel (%p375) target = $region52
      $region51: #{tpu_custom_call.1} parent=5 // pred_region
        %s379 = ssub.s32 %s21, 1
        %s380 = sand.u32 %s147, 1
        %s381 = scalar_lea.sflag [#allocation5], %s380
        %s382 = sand.u32 %s147, 1
        %s383 = smul.addr %s382, 128
        %s384 = scalar_lea.vmem [#allocation4], %s383
        // Predicated region
        $region53: #{tpu_custom_call.1} parent=51 // pred_check
          %p385 = pneg %p160
        $region54: #{tpu_custom_call.1} parent=51 // pred_check_branch
          %387 = sbr.rel (%p385) target = $region56
        $region55: #{tpu_custom_call.1} parent=51 // pred_region
          %389 = dma.done %s381, 2048
        $region56: #{tpu_custom_call.1} parent=51 // pred_fallthru
          _
        %s390 = sand.u32 %s203, 1
        %s391 = scalar_lea.sflag [#allocation8], %s390
        %s392 = sand.u32 %s203, 1
        %s393 = smul.addr %s392, 128
        %s394 = scalar_lea.vmem [#allocation7], %s393
        // Predicated region
        $region57: #{tpu_custom_call.1} parent=51 // pred_check
          %p395 = pneg %p216
        $region58: #{tpu_custom_call.1} parent=51 // pred_check_branch
          %397 = sbr.rel (%p395) target = $region60
        $region59: #{tpu_custom_call.1} parent=51 // pred_region
          %399 = dma.done %s391, 2048
        $region60: #{tpu_custom_call.1} parent=51 // pred_fallthru
          _
        %p400 = scmp.lt.s32.totalorder %s30, 3
        %s401 = scalar_select %p400, %s30, 3
        %s402 = smul.addr %s401, 2
        %s403 = smul.addr %s402, 8
        %s404 = scalar_lea.vmem %s0, %s403
        %p405 = pneg %p59
        %p406 = pneg %p56
        %p407 = scmp.lt.s32.totalorder %s30, 3
        %s408 = scalar_select %p407, %s30, 3
        %s409 = scalar_lea.vmem %s1, %s408
        %p410 = pneg %p85
        %p411 = pneg %p82
        %p412 = scmp.lt.s32.totalorder %s30, 3
        %s413 = scalar_select %p412, %s30, 3
        %s414 = smul.addr %s413, 2
        %s415 = smul.addr %s414, 8
        %s416 = scalar_lea.vmem %s2, %s415
        %p417 = pneg %p111
        %p418 = pneg %p108
        %p419 = pneg %p132
        %p420 = pneg %p129
        %s421 = sand.u32 %s147, 1
        %s422 = scalar_lea.sflag [#allocation5], %s421
        %s423 = sand.u32 %s147, 1
        %s424 = smul.addr %s423, 128
        %s425 = scalar_lea.vmem [#allocation4], %s424
        %p426 = pneg %p160
        %p427 = pneg %p157
        %s428 = smul.u32 2, %s31
        %p429 = scmp.lt.s32.totalorder %s30, 3
        %s430 = scalar_select %p429, %s30, 3
        %p431 = scmp.lt.s32.totalorder %s428, 1
        %s432 = scalar_select %p431, %s428, 1
        %s433 = smul.addr %s430, 2
        %s434 = sadd.s32 %s432, %s433
        %s435 = scalar_lea.vmem %s5, %s434
        %p436 = pneg %p188
        %p437 = pneg %p185
        %s438 = sand.u32 %s203, 1
        %s439 = scalar_lea.sflag [#allocation8], %s438
        %s440 = sand.u32 %s203, 1
        %s441 = smul.addr %s440, 128
        %s442 = scalar_lea.vmem [#allocation7], %s441
        %p443 = pneg %p216
        %p444 = pneg %p213
        %p445 = scmp.lt.s32.totalorder %s30, 3
        %s446 = scalar_select %p445, %s30, 3
        %s447 = scalar_lea.vmem %s7, %s446
        %p448 = pneg %p242
        %p449 = pneg %p239
        %p450 = pneg %p263
        %p451 = pneg %p260
        %p452 = scmp.lt.s32.totalorder %s30, 3
        %s453 = scalar_select %p452, %s30, 3
        %s454 = smul.addr %s453, 2
        %s455 = smul.addr %s454, 8
        %s456 = scalar_lea.vmem %s0, %s455
        %p457 = scmp.lt.s32.totalorder %s30, 3
        %s458 = scalar_select %p457, %s30, 3
        %s459 = scalar_lea.vmem %s1, %s458
        %p460 = scmp.lt.s32.totalorder %s30, 3
        %s461 = scalar_select %p460, %s30, 3
        %s462 = smul.addr %s461, 2
        %s463 = smul.addr %s462, 8
        %s464 = scalar_lea.vmem %s2, %s463
        %s465 = smul.u32 2, %s31
        %s466 = smul.u32 2, %s31
        %p467 = scmp.lt.s32.totalorder %s30, 3
        %s468 = scalar_select %p467, %s30, 3
        %p469 = scmp.lt.s32.totalorder %s466, 1
        %s470 = scalar_select %p469, %s466, 1
        %s471 = smul.addr %s468, 2
        %s472 = sadd.s32 %s470, %s471
        %s473 = scalar_lea.vmem %s5, %s472
        %s474 = smul.u32 2, %s31
        %s475 = smul.u32 32, %s31
        %p476 = scmp.lt.s32.totalorder %s30, 3
        %s477 = scalar_select %p476, %s30, 3
        %s478 = scalar_lea.vmem %s7, %s477
        %p480 = scmp.eq.s32.totalorder %s30, 0
        %p481 = scmp.eq.s32.totalorder %s31, 0
        %p482 = pnand %p480, %p481
        %p483 = pneg %p482
        // Predicated region
        $region61: #{tpu_custom_call.1} parent=51 // pred_check
          _
        $region62: #{tpu_custom_call.1} parent=51 // pred_check_branch
          %485 = sbr.rel (%p482) target = $region64
        $region63: #{tpu_custom_call.1} parent=51 // pred_region
          %486 = vst [vmem:[#allocation9] sm:$0xff] 0.0
          %487 = vst [vmem:[#allocation9 + $0x8] sm:$0xff] 0.0
          %488 = vst [vmem:[#allocation9 + $0x10] sm:$0xff] 0.0
          %489 = vst [vmem:[#allocation9 + $0x18] sm:$0xff] 0.0
        $region64: #{tpu_custom_call.1} parent=51 // pred_fallthru
          _
        // Predicated region
        $region65: #{tpu_custom_call.1} parent=51 // pred_check
          %p490 = pneg %p481
        $region66: #{tpu_custom_call.1} parent=51 // pred_check_branch
          %492 = sbr.rel (%p490) target = $region68
        $region67: #{tpu_custom_call.1} parent=51 // pred_region
          %v493 = vlaneseq
          %v494 = vand.u32 %v493, 127
          %v495 = vld [vmem:[%s456] sm:$0xff]
          %v496 = vld [vmem:[%s456 + $0x8] sm:$0xff]
          %497 = vset.pattern.permute.xlu0 0
          %498 = vperm.xlu0 %497, %v495
          %v499 = vpop.permute.xlu0 %498
          %500 = vset.pattern.permute.xlu0 0
          %501 = vperm.xlu0 %500, %v496
          %v502 = vpop.permute.xlu0 %501
          %vm503 = vcmp.eq.s32.totalorder %v494, %v499
          %vm504 = vcmp.eq.s32.totalorder %v494, %v502
          %v505 = vsel %vm503, 1.0, 0.0
          %v506 = vsel %vm504, 1.0, 0.0
          %v507 = vpack.c.bf16 %v506, %v505
          %v508 = vld [vmem:[%s3] sm:$0xf]
          %v509 = vld [vmem:[%s3 + $0x4] sm:$0xf]
          %v510 = vld [vmem:[%s3 + $0x8] sm:$0xf]
          %v511 = vld [vmem:[%s3 + $0xc] sm:$0xf]
          %v516 = vunpack.c.l.b16 %v508
          %v517 = vunpack.c.l.b16 %v509
          %v518 = vunpack.c.l.b16 %v510
          %v519 = vunpack.c.l.b16 %v511
          %v520 = vpack.c.b16 %v517, %v516
          %v521 = vpack.c.b16 %v519, %v518
          %vm524 = vcmask 261120
          %v526 = vsel %vm524, %v507, 0
          %528 = vmatpush.bf16.msra.mxu0 0
          %529 = vmatpush.bf16.msra.mxu0 0
          %530 = vmatpush.bf16.msra.mxu0 0
          %531 = vmatpush.bf16.msra.mxu0 0
          %532 = vmatpush.bf16.msra.mxu0 0
          %533 = vmatpush.bf16.msra.mxu0 0
          %534 = vmatpush.bf16.msra.mxu0 %v521
          %535 = vmatpush.bf16.msra.mxu0 %v520
          %536 = vmatmul.bf16.gmra.mxu0 %v526
          %v537 = vpop.f32.mrf.mxu0
          %v538 = vadd.f32 0.0, %v537
          %v539 = vpop.f32.mrf.mxu0
          %v540 = vadd.f32 0.0, %v539
          %541 = vdwg.mxu0
          %v542 = vpack.c.bf16 %v538, %v538
          %v543 = vpack.c.bf16 %v540, %v540
          %544 = vst [vmem:[#allocation2] sm:$0xf] %v542
          %545 = vst [vmem:[#allocation2 + $0x4] sm:$0xf] %v543
          %546 = vst [vmem:[#allocation3] sm:$0xff] 0.0
          %547 = vst [vmem:[#allocation3 + $0x8] sm:$0xff] 0.0
        $region68: #{tpu_custom_call.1} parent=51 // pred_fallthru
          _
        %v548 = vld [vmem:[#allocation2] sm:$0xf]
        %v549 = vld [vmem:[#allocation2 + $0x4] sm:$0xf]
        %v550 = vld [vmem:[%s384] sm:$0xff]
        %v551 = vld [vmem:[%s384 + $0x8] sm:$0xff]
        %v552 = vld [vmem:[%s384 + $0x10] sm:$0xff]
        %v553 = vld [vmem:[%s384 + $0x18] sm:$0xff]
        %v554 = vld [vmem:[%s384 + $0x20] sm:$0xff]
        %v555 = vld [vmem:[%s384 + $0x28] sm:$0xff]
        %v556 = vld [vmem:[%s384 + $0x30] sm:$0xff]
        %v557 = vld [vmem:[%s384 + $0x38] sm:$0xff]
        %v558 = vld [vmem:[%s384 + $0x40] sm:$0xff]
        %v559 = vld [vmem:[%s384 + $0x48] sm:$0xff]
        %v560 = vld [vmem:[%s384 + $0x50] sm:$0xff]
        %v561 = vld [vmem:[%s384 + $0x58] sm:$0xff]
        %v562 = vld [vmem:[%s384 + $0x60] sm:$0xff]
        %v563 = vld [vmem:[%s384 + $0x68] sm:$0xff]
        %v564 = vld [vmem:[%s384 + $0x70] sm:$0xff]
        %v565 = vld [vmem:[%s384 + $0x78] sm:$0xff]
        %v566 = vld [vmem:[%s473] sm:$0x3]
        %v568 = vperm.slane %v566, 0
        %v569 = vperm.slane %v566, 1
        %v574 = vunpack.c.l.b16 %v548
        %v575 = vunpack.c.l.b16 %v549
        %v576 = vpack.c.b16 %v575, %v574
        %v594 = vunpack.c.l.b16 %v550
        %v595 = vunpack.c.h.b16 %v550
        %v596 = vunpack.c.l.b16 %v551
        %v597 = vunpack.c.h.b16 %v551
        %v598 = vunpack.c.l.b16 %v552
        %v599 = vunpack.c.h.b16 %v552
        %v600 = vunpack.c.l.b16 %v553
        %v601 = vunpack.c.h.b16 %v553
        %v602 = vunpack.c.l.b16 %v554
        %v603 = vunpack.c.h.b16 %v554
        %v604 = vunpack.c.l.b16 %v555
        %v605 = vunpack.c.h.b16 %v555
        %v606 = vunpack.c.l.b16 %v556
        %v607 = vunpack.c.h.b16 %v556
        %v608 = vunpack.c.l.b16 %v557
        %v609 = vunpack.c.h.b16 %v557
        %v610 = vunpack.c.l.b16 %v558
        %v611 = vunpack.c.h.b16 %v558
        %v612 = vunpack.c.l.b16 %v559
        %v613 = vunpack.c.h.b16 %v559
        %v614 = vunpack.c.l.b16 %v560
        %v615 = vunpack.c.h.b16 %v560
        %v616 = vunpack.c.l.b16 %v561
        %v617 = vunpack.c.h.b16 %v561
        %v618 = vunpack.c.l.b16 %v562
        %v619 = vunpack.c.h.b16 %v562
        %v620 = vunpack.c.l.b16 %v563
        %v621 = vunpack.c.h.b16 %v563
        %v622 = vunpack.c.l.b16 %v564
        %v623 = vunpack.c.h.b16 %v564
        %v624 = vunpack.c.l.b16 %v565
        %v625 = vunpack.c.h.b16 %v565
        %v626 = vpack.c.b16 %v596, %v594
        %v627 = vpack.c.b16 %v597, %v595
        %v628 = vpack.c.b16 %v600, %v598
        %v629 = vpack.c.b16 %v601, %v599
        %v630 = vpack.c.b16 %v604, %v602
        %v631 = vpack.c.b16 %v605, %v603
        %v632 = vpack.c.b16 %v608, %v606
        %v633 = vpack.c.b16 %v609, %v607
        %v634 = vpack.c.b16 %v612, %v610
        %v635 = vpack.c.b16 %v613, %v611
        %v636 = vpack.c.b16 %v616, %v614
        %v637 = vpack.c.b16 %v617, %v615
        %v638 = vpack.c.b16 %v620, %v618
        %v639 = vpack.c.b16 %v621, %v619
        %v640 = vpack.c.b16 %v624, %v622
        %v641 = vpack.c.b16 %v625, %v623
        %658 = vmatpush.bf16.msra.mxu0 %v640
        %659 = vmatpush.bf16.msra.mxu0 %v638
        %660 = vmatpush.bf16.msra.mxu0 %v636
        %661 = vmatpush.bf16.msra.mxu0 %v634
        %662 = vmatpush.bf16.msra.mxu0 %v632
        %663 = vmatpush.bf16.msra.mxu0 %v630
        %664 = vmatpush.bf16.msra.mxu0 %v628
        %665 = vmatpush.bf16.msra.mxu0 %v626
        %666 = vmatmul.bf16.gmra.mxu0 %v576
        %v667 = vpop.f32.mrf.mxu0
        %v668 = vadd.f32 %v568, %v667
        %v669 = vpop.f32.mrf.mxu0
        %v670 = vadd.f32 %v568, %v669
        %671 = vdwg.mxu0
        %672 = vmatpush.bf16.msra.mxu0 %v641
        %673 = vmatpush.bf16.msra.mxu0 %v639
        %674 = vmatpush.bf16.msra.mxu0 %v637
        %675 = vmatpush.bf16.msra.mxu0 %v635
        %676 = vmatpush.bf16.msra.mxu0 %v633
        %677 = vmatpush.bf16.msra.mxu0 %v631
        %678 = vmatpush.bf16.msra.mxu0 %v629
        %679 = vmatpush.bf16.msra.mxu0 %v627
        %680 = vmatmul.bf16.gmra.mxu0 %v576
        %v681 = vpop.f32.mrf.mxu0
        %v682 = vadd.f32 %v569, %v681
        %v683 = vpop.f32.mrf.mxu0
        %v684 = vadd.f32 %v569, %v683
        %685 = vdwg.mxu0
        %v686 = vmax.f32 %v668, 0.0
        %v687 = vmax.f32 %v682, 0.0
        %v688 = vmax.f32 %v670, 0.0
        %v689 = vmax.f32 %v684, 0.0
        %v690 = vld [vmem:[#allocation3] sm:$0xff]
        %v691 = vld [vmem:[#allocation3 + $0x8] sm:$0xff]
        %v692 = vpack.c.bf16 %v688, %v686
        %v693 = vpack.c.bf16 %v689, %v687
        %v694 = vld [vmem:[%s394] sm:$0xf]
        %v695 = vld [vmem:[%s394 + $0x4] sm:$0xf]
        %v696 = vld [vmem:[%s394 + $0x8] sm:$0xf]
        %v697 = vld [vmem:[%s394 + $0xc] sm:$0xf]
        %v698 = vld [vmem:[%s394 + $0x10] sm:$0xf]
        %v699 = vld [vmem:[%s394 + $0x14] sm:$0xf]
        %v700 = vld [vmem:[%s394 + $0x18] sm:$0xf]
        %v701 = vld [vmem:[%s394 + $0x1c] sm:$0xf]
        %v702 = vld [vmem:[%s394 + $0x20] sm:$0xf]
        %v703 = vld [vmem:[%s394 + $0x24] sm:$0xf]
        %v704 = vld [vmem:[%s394 + $0x28] sm:$0xf]
        %v705 = vld [vmem:[%s394 + $0x2c] sm:$0xf]
        %v706 = vld [vmem:[%s394 + $0x30] sm:$0xf]
        %v707 = vld [vmem:[%s394 + $0x34] sm:$0xf]
        %v708 = vld [vmem:[%s394 + $0x38] sm:$0xf]
        %v709 = vld [vmem:[%s394 + $0x3c] sm:$0xf]
        %v710 = vld [vmem:[%s394 + $0x40] sm:$0xf]
        %v711 = vld [vmem:[%s394 + $0x44] sm:$0xf]
        %v712 = vld [vmem:[%s394 + $0x48] sm:$0xf]
        %v713 = vld [vmem:[%s394 + $0x4c] sm:$0xf]
        %v714 = vld [vmem:[%s394 + $0x50] sm:$0xf]
        %v715 = vld [vmem:[%s394 + $0x54] sm:$0xf]
        %v716 = vld [vmem:[%s394 + $0x58] sm:$0xf]
        %v717 = vld [vmem:[%s394 + $0x5c] sm:$0xf]
        %v718 = vld [vmem:[%s394 + $0x60] sm:$0xf]
        %v719 = vld [vmem:[%s394 + $0x64] sm:$0xf]
        %v720 = vld [vmem:[%s394 + $0x68] sm:$0xf]
        %v721 = vld [vmem:[%s394 + $0x6c] sm:$0xf]
        %v722 = vld [vmem:[%s394 + $0x70] sm:$0xf]
        %v723 = vld [vmem:[%s394 + $0x74] sm:$0xf]
        %v724 = vld [vmem:[%s394 + $0x78] sm:$0xf]
        %v725 = vld [vmem:[%s394 + $0x7c] sm:$0xf]
        %v758 = vunpack.c.l.b16 %v694
        %v759 = vunpack.c.l.b16 %v695
        %v760 = vunpack.c.l.b16 %v696
        %v761 = vunpack.c.l.b16 %v697
        %v762 = vunpack.c.l.b16 %v698
        %v763 = vunpack.c.l.b16 %v699
        %v764 = vunpack.c.l.b16 %v700
        %v765 = vunpack.c.l.b16 %v701
        %v766 = vunpack.c.l.b16 %v702
        %v767 = vunpack.c.l.b16 %v703
        %v768 = vunpack.c.l.b16 %v704
        %v769 = vunpack.c.l.b16 %v705
        %v770 = vunpack.c.l.b16 %v706
        %v771 = vunpack.c.l.b16 %v707
        %v772 = vunpack.c.l.b16 %v708
        %v773 = vunpack.c.l.b16 %v709
        %v774 = vunpack.c.l.b16 %v710
        %v775 = vunpack.c.l.b16 %v711
        %v776 = vunpack.c.l.b16 %v712
        %v777 = vunpack.c.l.b16 %v713
        %v778 = vunpack.c.l.b16 %v714
        %v779 = vunpack.c.l.b16 %v715
        %v780 = vunpack.c.l.b16 %v716
        %v781 = vunpack.c.l.b16 %v717
        %v782 = vunpack.c.l.b16 %v718
        %v783 = vunpack.c.l.b16 %v719
        %v784 = vunpack.c.l.b16 %v720
        %v785 = vunpack.c.l.b16 %v721
        %v786 = vunpack.c.l.b16 %v722
        %v787 = vunpack.c.l.b16 %v723
        %v788 = vunpack.c.l.b16 %v724
        %v789 = vunpack.c.l.b16 %v725
        %v790 = vpack.c.b16 %v759, %v758
        %v791 = vpack.c.b16 %v761, %v760
        %v792 = vpack.c.b16 %v763, %v762
        %v793 = vpack.c.b16 %v765, %v764
        %v794 = vpack.c.b16 %v767, %v766
        %v795 = vpack.c.b16 %v769, %v768
        %v796 = vpack.c.b16 %v771, %v770
        %v797 = vpack.c.b16 %v773, %v772
        %v798 = vpack.c.b16 %v775, %v774
        %v799 = vpack.c.b16 %v777, %v776
        %v800 = vpack.c.b16 %v779, %v778
        %v801 = vpack.c.b16 %v781, %v780
        %v802 = vpack.c.b16 %v783, %v782
        %v803 = vpack.c.b16 %v785, %v784
        %v804 = vpack.c.b16 %v787, %v786
        %v805 = vpack.c.b16 %v789, %v788
        %822 = vmatpush.bf16.msra.mxu0 %v797
        %823 = vmatpush.bf16.msra.mxu0 %v796
        %824 = vmatpush.bf16.msra.mxu0 %v795
        %825 = vmatpush.bf16.msra.mxu0 %v794
        %826 = vmatpush.bf16.msra.mxu0 %v793
        %827 = vmatpush.bf16.msra.mxu0 %v792
        %828 = vmatpush.bf16.msra.mxu0 %v791
        %829 = vmatpush.bf16.msra.mxu0 %v790
        %830 = vmatmul.bf16.gmra.mxu0 %v692
        %v831 = vpop.f32.mrf.mxu0
        %v832 = vadd.f32 0.0, %v831
        %v833 = vpop.f32.mrf.mxu0
        %v834 = vadd.f32 0.0, %v833
        %835 = vdwg.mxu0
        %836 = vmatpush.bf16.msra.mxu0 %v805
        %837 = vmatpush.bf16.msra.mxu0 %v804
        %838 = vmatpush.bf16.msra.mxu0 %v803
        %839 = vmatpush.bf16.msra.mxu0 %v802
        %840 = vmatpush.bf16.msra.mxu0 %v801
        %841 = vmatpush.bf16.msra.mxu0 %v800
        %842 = vmatpush.bf16.msra.mxu0 %v799
        %843 = vmatpush.bf16.msra.mxu0 %v798
        %844 = vmatmul.bf16.gmra.mxu0 %v693
        %v845 = vpop.f32.mrf.mxu0
        %v846 = vadd.f32 %v832, %v845
        %v847 = vpop.f32.mrf.mxu0
        %v848 = vadd.f32 %v834, %v847
        %849 = vdwg.mxu0
        %v850 = vadd.f32 %v690, %v846
        %v851 = vadd.f32 %v691, %v848
        %852 = vst [vmem:[#allocation3] sm:$0xff] %v850
        %853 = vst [vmem:[#allocation3 + $0x8] sm:$0xff] %v851
        // Predicated region
        $region69: #{tpu_custom_call.1} parent=51 // pred_check
          %p854 = pneg %p481
        $region70: #{tpu_custom_call.1} parent=51 // pred_check_branch
          %856 = sbr.rel (%p854) target = $region72
        $region71: #{tpu_custom_call.1} parent=51 // pred_region
          %v857 = vld [vmem:[#allocation3] sm:$0xff]
          %v858 = vld [vmem:[#allocation3 + $0x8] sm:$0xff]
          %v859 = vld [vmem:[%s478] sm:$0x1]
          %v861 = vperm.slane %v859, 0
          %v863 = vadd.f32 %v857, %v861
          %v864 = vadd.f32 %v858, %v861
          %v865 = vld [vmem:[%s464] sm:$0xff]
          %v866 = vld [vmem:[%s464 + $0x8] sm:$0xff]
          %868 = vset.pattern.permute.xlu0 0
          %869 = vperm.xlu0 %868, %v865
          %v870 = vpop.permute.xlu0 %869
          %873 = vset.pattern.permute.xlu0 0
          %874 = vperm.xlu0 %873, %v866
          %v875 = vpop.permute.xlu0 %874
          %v877 = vmul.f32 %v863, %v870
          %v878 = vmul.f32 %v864, %v875
          %v879 = vlaneseq
          %v880 = vshrl.u32 %v879, 7
          %v881 = vadd.s32 %v880, 8
          %v882 = vadd.s32 %v880, 16
          %v883 = vadd.s32 %v880, 24
          %v884 = vld [vmem:[%s459] sm:$0x1]
          %v885 = vperm.slane %v884, 0
          %vm886 = vcmp.eq.s32.totalorder %v880, %v885
          %vm887 = vcmp.eq.s32.totalorder %v881, %v885
          %vm888 = vcmp.eq.s32.totalorder %v882, %v885
          %vm889 = vcmp.eq.s32.totalorder %v883, %v885
          %v890 = vsel %vm886, 1.0, 0.0
          %v891 = vsel %vm887, 1.0, 0.0
          %v892 = vsel %vm888, 1.0, 0.0
          %v893 = vsel %vm889, 1.0, 0.0
          %v894 = vld [vmem:[#allocation9] sm:$0xff]
          %v895 = vld [vmem:[#allocation9 + $0x8] sm:$0xff]
          %v896 = vld [vmem:[#allocation9 + $0x10] sm:$0xff]
          %v897 = vld [vmem:[#allocation9 + $0x18] sm:$0xff]
          %vm898 = vcmask 130048
          %v900 = vsel %vm898, %v890, 0
          %v903 = vsel %vm898, %v891, 0
          %v906 = vsel %vm898, %v892, 0
          %v909 = vsel %vm898, %v893, 0
          %911 = vmatpush.msra.mxu0 0.0
          %912 = vmatpush.msra.mxu0 0.0
          %913 = vmatpush.msra.mxu0 0.0
          %914 = vmatpush.msra.mxu0 0.0
          %915 = vmatpush.msra.mxu0 0.0
          %916 = vmatpush.msra.mxu0 0.0
          %917 = vmatpush.msra.mxu0 0.0
          %918 = vmatpush.msra.mxu0 0.0
          %919 = vmatpush.msra.mxu0 0.0
          %920 = vmatpush.msra.mxu0 0.0
          %921 = vmatpush.msra.mxu0 0.0
          %922 = vmatpush.msra.mxu0 0.0
          %923 = vmatpush.msra.mxu0 0.0
          %924 = vmatpush.msra.mxu0 0.0
          %925 = vmatpush.msra.mxu0 %v878
          %926 = vmatpush.msra.mxu0 %v877
          %927 = vmatmul.f32.gmra.mxu0 %v900
          %v928 = vpop.f32.mrf.mxu0
          %v929 = vadd.f32 0.0, %v928
          %930 = vmatmul.f32.gmra.mxu0 %v903
          %v931 = vpop.f32.mrf.mxu0
          %v932 = vadd.f32 0.0, %v931
          %933 = vmatmul.f32.gmra.mxu0 %v906
          %v934 = vpop.f32.mrf.mxu0
          %v935 = vadd.f32 0.0, %v934
          %936 = vmatmul.f32.gmra.mxu0 %v909
          %v937 = vpop.f32.mrf.mxu0
          %v938 = vadd.f32 0.0, %v937
          %939 = vdwg.mxu0
          %v940 = vadd.f32 %v894, %v929
          %v941 = vadd.f32 %v895, %v932
          %v942 = vadd.f32 %v896, %v935
          %v943 = vadd.f32 %v897, %v938
          %944 = vst [vmem:[#allocation9] sm:$0xff] %v940
          %945 = vst [vmem:[#allocation9 + $0x8] sm:$0xff] %v941
          %946 = vst [vmem:[#allocation9 + $0x10] sm:$0xff] %v942
          %947 = vst [vmem:[#allocation9 + $0x18] sm:$0xff] %v943
        $region72: #{tpu_custom_call.1} parent=51 // pred_fallthru
          _
        // Predicated region
        $region73: #{tpu_custom_call.1} parent=51 // pred_check
          %p948 = pneg %p260
        $region74: #{tpu_custom_call.1} parent=51 // pred_check_branch
          %950 = sbr.rel (%p948) target = $region76
        $region75: #{tpu_custom_call.1} parent=51 // pred_region
          %952 = vsyncadd [#allocation6], 0
          %s953 = sshll.u32 [#allocation9], 4
          %s954 = int_to_ptr.vmem [resolvable:$true] %s953
          %s955 = sshll.u32 %s8, 4
          %s956 = int_to_ptr.hbm [resolvable:$true] %s955
          %961 = dma.vmem_to_hbm [thread:$0]  %s954, 512, %s956, [#allocation6], 128, 128, 8
        $region76: #{tpu_custom_call.1} parent=51 // pred_fallthru
          _
        // Predicated region
        $region77: #{tpu_custom_call.1} parent=51 // pred_check
          %p962 = pneg %p260
        $region78: #{tpu_custom_call.1} parent=51 // pred_check_branch
          %964 = sbr.rel (%p962) target = $region80
        $region79: #{tpu_custom_call.1} parent=51 // pred_region
          %966 = dma.done [#allocation6], 512
        $region80: #{tpu_custom_call.1} parent=51 // pred_fallthru
          _
      $region52: #{tpu_custom_call.1} parent=5 // pred_fallthru
        _
      %p967 = scmp.le.s32.totalorder 2, %s21
      // Predicated region
      $region81: #{tpu_custom_call.1} parent=5 // pred_check
        %p968 = pneg %p967
      $region82: #{tpu_custom_call.1} parent=5 // pred_check_branch
        %970 = sbr.rel (%p968) target = $region84
      $region83: #{tpu_custom_call.1} parent=5 // pred_region
        %s971 = ssub.s32 %s21, 2
      $region84: #{tpu_custom_call.1} parent=5 // pred_fallthru
        _
    $region6: #{tpu_custom_call.1} parent=1 // loop_footer
      %s25 = sadd.s32 1, %s21
    $region7: #{tpu_custom_call.1} parent=1 // loop_footer_branch
      %20 = sbr.rel target = $region3
    $region8: #{tpu_custom_call.1} parent=1 // loop_exit
      _
    %972 = vsyncpa [#allocation5], 1
    %s973 = scalar_lea.sflag [#allocation5], 1
    %974 = vsyncpa %s973, 1
    %975 = vsyncpa [#allocation8], 1
    %s976 = scalar_lea.sflag [#allocation8], 1
    %977 = vsyncpa %s976, 1
    %978 = vsyncpa [#allocation6], 1
    %s979 = scalar_lea.sflag [#allocation6], 1
    %980 = vsyncpa %s979, 1

</llo_original>
